<compile_context>
chip_gen: v6e
topology: v6e:2x2x1
jax: 0.10.0
libtpu: 0.0.40
codegen_flags: <defaults>
</compile_context>

<pallas_src>
import functools
import math

import jax
import jax.numpy as jnp
from jax import lax
from jax.experimental import pallas as pl
from jax.experimental.pallas import tpu as pltpu

BN_EPS = 1e-5

# Scoped-VMEM limit handed to Mosaic: lifts the 16 MiB (v5e) / 32 MiB
# (v6e, v7x) default scoped ceilings while leaving headroom inside v7x's
# 64 MiB physical VMEM.
VMEM_LIMIT_BYTES = 48 * 1024 * 1024
# Tile-accounting budget used to size the graph_s row block (kept well below
# VMEM_LIMIT_BYTES to leave room for compiler temporaries / spill slack).
GRAPH_S_VMEM_BUDGET = 26 * 1024 * 1024
# Keep at least this many grid steps along "parallel" axes so both v7x
# TensorCores get work.
MIN_GRID_STEPS = 4


def _round_up(v, m):
    return (v + m - 1) // m * m


# ---------------------------------------------------------------------------
# Kernel 1: Linear + per-chunk BatchNorm1d (training-mode statistics)
# ---------------------------------------------------------------------------
def linear_bn_kernel(x_ref, w_ref, gamma_ref, beta_ref, o_ref, acc_ref, *,
                     chunks_per_step, batch_size):
    # x_ref: (m, tk) f32   w_ref: (tk, cp) bf16   gamma/beta: (1, cp) f32
    # o_ref: (m, cp) f32   acc_ref: (m, cp) f32 scratch (resident across k)
    k = pl.program_id(1)

    @pl.when(k == 0)
    def _():
        acc_ref[...] = jnp.zeros_like(acc_ref)

    # bf16 x bf16 -> f32 accumulate: single-pass MXU path.  The LHS cast is
    # done in-VMEM so the HBM read of the activations stays a single pass
    # (casting in the wrapper would add an extra full HBM round trip).
    acc_ref[...] += jnp.dot(x_ref[...].astype(jnp.bfloat16), w_ref[...],
                            preferred_element_type=jnp.float32)

    @pl.when(k == pl.num_programs(1) - 1)
    def _():
        y = acc_ref[...]
        cp = y.shape[-1]
        # NOTE: the nn.Linear bias is intentionally omitted -- training-mode
        # BN subtracts the per-feature mean right afterwards, so a constant
        # per-feature bias cancels exactly.
        yc = y.reshape(chunks_per_step, batch_size, cp)
        mean = jnp.mean(yc, axis=1, keepdims=True)                 # (cps,1,cp)
        var = jnp.maximum(
            jnp.mean(yc * yc, axis=1, keepdims=True) - mean * mean, 0.0)
        g = gamma_ref[...].reshape(1, 1, cp)
        b = beta_ref[...].reshape(1, 1, cp)
        scale = g * lax.rsqrt(var + BN_EPS)                        # (cps,1,cp)
        shift = b - mean * scale
        o_ref[...] = (yc * scale + shift).reshape(
            chunks_per_step * batch_size, cp).astype(o_ref.dtype)


def _pick_chunks_per_step(num_chunks, batch_size, target_m,
                          min_grid=MIN_GRID_STEPS):
    # Smallest chunk multiple whose row count is 8-aligned (unmasked stores).
    align = 8 // math.gcd(batch_size, 8)
    cap = max(1, target_m // max(1, batch_size))
    # Keep >= min_grid grid steps when possible (v7x has 2 TensorCores).
    cap = min(cap, max(1, num_chunks // min(min_grid, num_chunks)))
    cps = min(num_chunks, max(align, (cap // align) * align))
    while cps > align and num_chunks % cps:
        cps -= align
    if num_chunks % cps:
        # No aligned divisor: fall back to one chunk per step (masked stores,
        # but still fully pipelined -- never the whole-array OOM cliff).
        cps = 1
    return cps


def _pick_tk(d, max_tk=2048):
    if d <= max_tk:
        return d
    tk = max_tk
    while tk > 128 and d % tk:
        tk -= 128
    return tk if d % tk == 0 else d


def linear_bn(x_flat, w, gamma, beta, *, batch_size, target_m=256):
    total_num, d = x_flat.shape
    out_c = w.shape[1]
    num_chunks = total_num // batch_size
    cps = _pick_chunks_per_step(num_chunks, batch_size, target_m)
    m = cps * batch_size
    tk = _pick_tk(d)

    # Pad the feature dim to a 128-lane multiple so stores are unmasked
    # (lane-dense output); sliced back below.  Padded gamma/beta are zero, so
    # the padded columns come out exactly zero (scale = shift = 0).
    cp = _round_up(out_c, 128)
    pad = cp - out_c
    if pad:
        w = jnp.pad(w, ((0, 0), (0, pad)))
        gamma = jnp.pad(gamma, ((0, 0), (0, pad)))
        beta = jnp.pad(beta, ((0, 0), (0, pad)))
    w_bf = w.astype(jnp.bfloat16)       # one-time cast; halves weight DMA

    out = pl.pallas_call(
        functools.partial(linear_bn_kernel, chunks_per_step=cps,
                          batch_size=batch_size),
        out_shape=jax.ShapeDtypeStruct((total_num, cp), jnp.float32),
        grid_spec=pltpu.PrefetchScalarGridSpec(
            num_scalar_prefetch=0,
            grid=(num_chunks // cps, d // tk),     # reduction axis last
            in_specs=[
                pl.BlockSpec((m, tk), lambda s, k: (s, k)),
                pl.BlockSpec((tk, cp), lambda s, k: (k, 0)),
                pl.BlockSpec((1, cp), lambda s, k: (0, 0)),
                pl.BlockSpec((1, cp), lambda s, k: (0, 0)),
            ],
            out_specs=pl.BlockSpec((m, cp), lambda s, k: (s, 0)),
            scratch_shapes=[pltpu.VMEM((m, cp), jnp.float32)],
        ),
        compiler_params=pltpu.CompilerParams(
            dimension_semantics=("parallel", "arbitrary"),
            vmem_limit_bytes=VMEM_LIMIT_BYTES),
    )(x_flat, w_bf, gamma, beta)
    return out[:, :out_c] if pad else out


# ---------------------------------------------------------------------------
# Kernel 2: sparse graph S via factored pairwise score + top-k softmax,
#           with the loss_GL row partials fused in.
# ---------------------------------------------------------------------------
def graph_s_kernel(x_ref, xt_ref, a_row_ref, aw_col_ref, sq_col_ref, ab_ref,
                   s_ref, ds_ref, ss_ref, *, topk, n_real):
    # x_ref:      (rows, C) row block of node features (pipelined per step)
    # xt_ref:     (C, N)    all node features, transposed (resident RHS)
    # a_row_ref:  (1, C)    S_linear weight
    # aw_col_ref: (1, N)    hoisted sum_k a_k x_jk^2 (precomputed in wrapper)
    # sq_col_ref: (1, N)    hoisted sum_k x_jk^2     (precomputed in wrapper)
    # ab_ref:     (1, 1)    S_linear bias
    # s_ref:      (rows, N) output row block of S
    # ds_ref/ss_ref: (rows, 1) fused loss partials sum_j dist*S / sum_j S
    x_rows = x_ref[...]
    x_t = xt_ref[...]
    a_row = a_row_ref[...]
    neg_inf = jnp.float32(-jnp.inf)

    # s_ij = ReLU(sum_k a_k (x_ik - x_jk)^2 + b)
    #      = ReLU((x_i^2).a + (x_j^2).a - 2 (x_i o a) . x_j + b)
    xa = x_rows * a_row                                           # (rows, C)
    term1 = jnp.sum(xa * x_rows, axis=1, keepdims=True)           # (rows, 1)
    rownorm = jnp.sum(x_rows * x_rows, axis=1, keepdims=True)     # (rows, 1)
    term3 = jnp.dot(xa, x_t, preferred_element_type=jnp.float32)  # (rows, N)
    gram = jnp.dot(x_rows, x_t, preferred_element_type=jnp.float32)

    scores = jnp.maximum(
        term1 + aw_col_ref[...] - 2.0 * term3 + ab_ref[...], 0.0)
    # TODO(synk): the reference's elementwise dist[dist != dist] = 0 (NaN
    # zeroing) is not reproducible in the factored matmul form; results are
    # identical for finite inputs.

    if n_real < scores.shape[-1]:
        # Padded node columns must never enter the top-k support.
        col_ids = lax.broadcasted_iota(jnp.int32, scores.shape, 1)
        scores = jnp.where(col_ids < n_real, scores, neg_inf)

    # k-th largest (distinct) score per row via a chained per-row scalar
    # threshold; the (rows, N) score tile is never rewritten.
    mx = jnp.max(scores, axis=-1, keepdims=True)                  # (rows, 1)

    def step(_, thr):
        return jnp.max(jnp.where(scores < thr, scores, neg_inf),
                       axis=-1, keepdims=True)

    thresh = lax.fori_loop(0, topk - 1, step, mx, unroll=True)
    # TODO(synk): torch.topk lowest-index tie-breaking is not reproducible
    # with a threshold mask; ties at the k-th value over-select (documented).

    # Softmax over the selected top-k values; everything else stays 0.
    e = jnp.where(scores >= thresh, jnp.exp(scores - mx), 0.0)
    denom = jnp.sum(e, axis=-1, keepdims=True)
    s_vals = e * (1.0 / denom)                     # exact divide (rows,1)
    s_ref[...] = s_vals.astype(s_ref.dtype)

    # Fused loss_GL partials: dist_ij = clamp(||x_i||^2 + ||x_j||^2 - 2 x_i.x_j, 0)
    dist = jnp.maximum(rownorm + sq_col_ref[...] - 2.0 * gram, 0.0)
    ds_ref[...] = jnp.sum(dist * s_vals, axis=-1, keepdims=True)
    ss_ref[...] = jnp.sum(s_vals, axis=-1, keepdims=True)


def _pick_rows(n_pad, c, s_bytes, *, max_rows=256,
               budget=GRAPH_S_VMEM_BUDGET, min_grid=MIN_GRID_STEPS):
    # Resident (constant-index) operands: x_t (double-buffered by default)
    # plus the small (1, N)/(1, C) vectors.
    resident = 2 * c * n_pad * 4 + 4 * n_pad * 4 + 4 * c * 4 + (8 << 10)
    # Per output row: ~6 live (rows, N) f32 temporaries (scores / term3 /
    # gram / where / e / dist), double-buffered S output block, and the
    # pipelined (rows, C) input block + tiny loss outputs.
    per_row = n_pad * (6 * 4 + 2 * s_bytes) + 2 * c * 4 + 16
    cap = max(8, (budget - resident) // per_row)
    cap = min(cap, max_rows, n_pad)
    cap = min(cap, max(8, n_pad // min_grid))      # keep >= min_grid steps
    rows = max(8, cap - cap % 8)
    while n_pad % rows:
        rows -= 8
    return rows


def graph_s(x, a_row, a_bias, *, topk, max_rows=256,
            s_dtype=jnp.bfloat16):
    n, c = x.shape
    # Pad the node count to a 128-lane multiple: unmasked lane-dense stores
    # for every S row block; padded columns are masked out of the top-k
    # inside the kernel and padded rows are sliced off below.
    n_pad = _round_up(n, 128)
    x_p = jnp.pad(x, ((0, n_pad - n), (0, 0))) if n_pad != n else x
    x_t = x_p.T                                    # (C, N) resident RHS
    sq = x_p * x_p
    aw_col = jnp.sum(sq * a_row, axis=1).reshape(1, n_pad)   # hoisted term2
    sq_col = jnp.sum(sq, axis=1).reshape(1, n_pad)           # hoisted ||x_j||^2
    rows = _pick_rows(n_pad, c, jnp.dtype(s_dtype).itemsize,
                      max_rows=max_rows)

    s_p, ds_p, ss_p = pl.pallas_call(
        functools.partial(graph_s_kernel, topk=topk, n_real=n),
        out_shape=(
            jax.ShapeDtypeStruct((n_pad, n_pad), s_dtype),
            jax.ShapeDtypeStruct((n_pad, 1), jnp.float32),
            jax.ShapeDtypeStruct((n_pad, 1), jnp.float32),
        ),
        grid_spec=pltpu.PrefetchScalarGridSpec(
            num_scalar_prefetch=0,
            grid=(n_pad // rows,),
            in_specs=[
                pl.BlockSpec((rows, c), lambda i: (i, 0)),
                pl.BlockSpec((c, n_pad), lambda i: (0, 0)),
                pl.BlockSpec((1, c), lambda i: (0, 0)),
                pl.BlockSpec((1, n_pad), lambda i: (0, 0)),
                pl.BlockSpec((1, n_pad), lambda i: (0, 0)),
                pl.BlockSpec((1, 1), lambda i: (0, 0)),
            ],
            out_specs=(
                pl.BlockSpec((rows, n_pad), lambda i: (i, 0)),
                pl.BlockSpec((rows, 1), lambda i: (i, 0)),
                pl.BlockSpec((rows, 1), lambda i: (i, 0)),
            ),
        ),
        compiler_params=pltpu.CompilerParams(
            dimension_semantics=("parallel",),
            vmem_limit_bytes=VMEM_LIMIT_BYTES),
    )(x_p, x_t, a_row, aw_col, sq_col, a_bias)
    return s_p[:n, :n], ds_p[:n, 0], ss_p[:n, 0]


# ---------------------------------------------------------------------------
# GraphLearning forward (the two kernels) + GLCN-level glue in plain JAX
# ---------------------------------------------------------------------------
def graph_learning_forward(inputs_nchw, params, *, batch_size, topk,
                           target_m=256, max_rows=256, s_dtype=jnp.bfloat16):
    total_num = inputs_nchw.shape[0]
    x_flat = inputs_nchw.reshape(total_num, -1)       # matches .view(bs, -1)
    feats = linear_bn(x_flat, params["w"], params["gamma"], params["beta"],
                      batch_size=batch_size, target_m=target_m)
    s, ds_rows, ss_rows = graph_s(feats, params["a"], params["a_bias"],
                                  topk=topk, max_rows=max_rows,
                                  s_dtype=s_dtype)
    return feats, s, ds_rows, ss_rows


def glcn_forward(inputs_nchw, params, *, batch_size, topk, gamma_reg=0.01,
                 s_dtype=jnp.bfloat16):
    feats, s, ds_rows, ss_rows = graph_learning_forward(
        inputs_nchw, params, batch_size=batch_size, topk=topk,
        s_dtype=s_dtype)
    # loss_GL = sum(pairwise_distances(feats) * S) + gamma_reg * sum(S),
    # accumulated inside kernel 2 (no dense (N, N) distance matrix, no
    # re-read of S from HBM).
    loss_gl = jnp.sum(ds_rows) + gamma_reg * jnp.sum(ss_rows)
    # GCN head (eval mode: dropout is identity).
    # TODO(synk): GraphConvolution is not defined in the spec; the standard
    # Kipf layer adj @ (x @ W) + b is assumed and kept as plain-JAX glue.
    h = jnp.maximum(s @ (feats @ params["gc1_w"]) + params["gc1_b"], 0.0)
    logits = s @ (h @ params["gc2_w"]) + params["gc2_b"]
    semi = jax.nn.log_softmax(logits, axis=1)
    return semi, loss_gl, s


if __name__ == "__main__":
    # Small shapes consistent with the module (spatial 32x32 is hard-coded by
    # nn.Linear(32*32*in_channels, out_channels)).
    in_channels = 1
    out_channels = 32
    total_num = 16
    batch_size = 8
    topk = 4
    ngcn = 16
    nclass = 8
    d = 32 * 32 * in_channels

    key = jax.random.PRNGKey(0)
    k_w, k_a, k_x, k_g1, k_g2 = jax.random.split(key, 5)

    params = {
        "w": jax.random.normal(k_w, (d, out_channels), jnp.float32)
              * (1.0 / jnp.sqrt(d)),
        "gamma": jnp.ones((1, out_channels), jnp.float32),    # BN default init
        "beta": jnp.zeros((1, out_channels), jnp.float32),
        # S_linear: positive weight / bias so ReLU scores have no exact ties
        # at the top-k boundary (keeps top-k selection well-defined).
        "a": jnp.abs(jax.random.normal(k_a, (1, out_channels), jnp.float32))
              * 0.1,
        "a_bias": jnp.array([[0.05]], jnp.float32),
        "gc1_w": jax.random.normal(k_g1, (out_channels, ngcn), jnp.float32)
                  * (1.0 / jnp.sqrt(out_channels)),
        "gc1_b": jnp.zeros((ngcn,), jnp.float32),
        "gc2_w": jax.random.normal(k_g2, (ngcn, nclass), jnp.float32)
                  * (1.0 / jnp.sqrt(ngcn)),
        "gc2_b": jnp.zeros((nclass,), jnp.float32),
    }

    inputs = jax.random.normal(k_x, (total_num, in_channels, 32, 32),
                               jnp.float32)

    fwd = jax.jit(functools.partial(glcn_forward, batch_size=batch_size,
                                    topk=topk))
    semi, loss_gl, S = fwd(inputs, params)
    jax.block_until_ready((semi, loss_gl, S))

    assert semi.shape == (total_num, nclass)
    assert S.shape == (total_num, total_num)
    assert bool(jnp.isfinite(loss_gl))
    assert bool(jnp.all(jnp.isfinite(semi)))
    # Each row of S is a softmax over its top-k support -> rows sum to ~1
    # (bf16 storage leaves a small residual).
    row_sums = jnp.sum(S.astype(jnp.float32), axis=-1)
    assert jnp.allclose(row_sums, 1.0, atol=1e-2)
    print("KERNEL_OK")
</pallas_src>

<mosaic_0001>
module attributes {stable_mosaic.version = 11 : i64} {
  func.func @linear_bn_kernel(%arg0: i32, %arg1: i32, %arg2: memref<8x1024xf32, #tpu.memory_space<vmem>>, %arg3: memref<1024x128xbf16, #tpu.memory_space<vmem>>, %arg4: memref<1x128xf32, #tpu.memory_space<vmem>>, %arg5: memref<1x128xf32, #tpu.memory_space<vmem>>, %arg6: memref<8x128xf32, #tpu.memory_space<vmem>>, %arg7: memref<8x128xf32, #tpu.memory_space<vmem>>) attributes {dimension_semantics = [#tpu.dimension_semantics<parallel>, #tpu.dimension_semantics<arbitrary>], iteration_bounds = array<i64: 2, 1>, scalar_prefetch = 0 : i64, scratch_operands = 1 : i64, tpu.core_type = #tpu.core_type<tc>, window_params = [{transform_indices = @transform_0, window_bounds = array<i64: 8, 1024>}, {transform_indices = @transform_1, window_bounds = array<i64: 1024, 128>}, {pipeline_mode = #tpu.pipeline_mode<synchronous>, transform_indices = @transform_2, window_bounds = array<i64: 1, 128>}, {pipeline_mode = #tpu.pipeline_mode<synchronous>, transform_indices = @transform_3, window_bounds = array<i64: 1, 128>}, {transform_indices = @transform_4, window_bounds = array<i64: 8, 128>}]} {
    %c0_i32 = arith.constant 0 : i32
    %0 = arith.cmpi eq, %arg1, %c0_i32 : i32
    %1 = arith.extui %0 : i1 to i32
    %c0_i32_0 = arith.constant 0 : i32
    %2 = arith.cmpi ne, %1, %c0_i32_0 : i32
    scf.if %2 {
      %cst_10 = arith.constant 0.000000e+00 : f32
      %13 = vector.broadcast %cst_10 : f32 to vector<8x128xf32>
      %c0_11 = arith.constant 0 : index
      %c0_12 = arith.constant 0 : index
      %14 = vector.load %arg7[%c0_11, %c0_12] : memref<8x128xf32, #tpu.memory_space<vmem>>, vector<8x128xf32>
      tpu.vector_store %arg7[%c0_11, %c0_12], %13 {strides = array<i32>} : memref<8x128xf32, #tpu.memory_space<vmem>>, vector<8x128xf32>,
    } else {
    }
    %c0 = arith.constant 0 : index
    %c0_1 = arith.constant 0 : index
    %3 = vector.load %arg7[%c0, %c0_1] : memref<8x128xf32, #tpu.memory_space<vmem>>, vector<8x128xf32>
    %c0_2 = arith.constant 0 : index
    %c0_3 = arith.constant 0 : index
    %4 = vector.load %arg2[%c0_2, %c0_3] : memref<8x1024xf32, #tpu.memory_space<vmem>>, vector<8x1024xf32>
    %5 = arith.truncf %4 : vector<8x1024xf32> to vector<8x1024xbf16>
    %c0_4 = arith.constant 0 : index
    %c0_5 = arith.constant 0 : index
    %6 = vector.load %arg3[%c0_4, %c0_5] : memref<1024x128xbf16, #tpu.memory_space<vmem>>, vector<1024x128xbf16>
    %cst = arith.constant dense<0.000000e+00> : vector<8x128xf32>
    %7 = tpu.matmul %5, %6, %cst {dimension_numbers = #tpu.dot_dimension_numbers<[1], [0], [0], [1], [0, 0, 1, 1], [], []>} : vector<8x1024xbf16>, vector<1024x128xbf16>, vector<8x128xf32> -> vector<8x128xf32>
    %8 = arith.addf %3, %7 : vector<8x128xf32>
    %c0_6 = arith.constant 0 : index
    %c0_7 = arith.constant 0 : index
    %9 = vector.load %arg7[%c0_6, %c0_7] : memref<8x128xf32, #tpu.memory_space<vmem>>, vector<8x128xf32>
    tpu.vector_store %arg7[%c0_6, %c0_7], %8 {strides = array<i32>} : memref<8x128xf32, #tpu.memory_space<vmem>>, vector<8x128xf32>,
    %c0_i32_8 = arith.constant 0 : i32
    %10 = arith.cmpi eq, %arg1, %c0_i32_8 : i32
    %11 = arith.extui %10 : i1 to i32
    %c0_i32_9 = arith.constant 0 : i32
    %12 = arith.cmpi ne, %11, %c0_i32_9 : i32
    scf.if %12 {
      %c0_10 = arith.constant 0 : index
      %c0_11 = arith.constant 0 : index
      %13 = vector.load %arg7[%c0_10, %c0_11] : memref<8x128xf32, #tpu.memory_space<vmem>>, vector<8x128xf32>
      %14 = vector.shape_cast %13 : vector<8x128xf32> to vector<1x8x128xf32>
      %cst_12 = arith.constant dense<0.000000e+00> : vector<1x128xf32>
      %15 = vector.multi_reduction <add>, %14, %cst_12 [1] : vector<1x8x128xf32> to vector<1x128xf32>
      %16 = vector.shape_cast %15 : vector<1x128xf32> to vector<1x1x128xf32>
      %cst_13 = arith.constant 8.000000e+00 : f32
      %17 = vector.broadcast %cst_13 : f32 to vector<1x1x128xf32>
      %18 = arith.divf %16, %17 : vector<1x1x128xf32>
      %19 = arith.mulf %14, %14 : vector<1x8x128xf32>
      %cst_14 = arith.constant dense<0.000000e+00> : vector<1x128xf32>
      %20 = vector.multi_reduction <add>, %19, %cst_14 [1] : vector<1x8x128xf32> to vector<1x128xf32>
      %21 = vector.shape_cast %20 : vector<1x128xf32> to vector<1x1x128xf32>
      %cst_15 = arith.constant 8.000000e+00 : f32
      %22 = vector.broadcast %cst_15 : f32 to vector<1x1x128xf32>
      %23 = arith.divf %21, %22 : vector<1x1x128xf32>
      %24 = arith.mulf %18, %18 : vector<1x1x128xf32>
      %25 = arith.subf %23, %24 : vector<1x1x128xf32>
      %cst_16 = arith.constant 0.000000e+00 : f32
      %26 = vector.broadcast %cst_16 : f32 to vector<1x1x128xf32>
      %27 = arith.maximumf %25, %26 : vector<1x1x128xf32>
      %c0_17 = arith.constant 0 : index
      %c0_18 = arith.constant 0 : index
      %28 = vector.load %arg4[%c0_17, %c0_18] : memref<1x128xf32, #tpu.memory_space<vmem>>, vector<1x128xf32>
      %29 = vector.shape_cast %28 : vector<1x128xf32> to vector<1x1x128xf32>
      %c0_19 = arith.constant 0 : index
      %c0_20 = arith.constant 0 : index
      %30 = vector.load %arg5[%c0_19, %c0_20] : memref<1x128xf32, #tpu.memory_space<vmem>>, vector<1x128xf32>
      %31 = vector.shape_cast %30 : vector<1x128xf32> to vector<1x1x128xf32>
      %cst_21 = arith.constant 9.99999974E-6 : f32
      %32 = vector.broadcast %cst_21 : f32 to vector<1x1x128xf32>
      %33 = arith.addf %27, %32 : vector<1x1x128xf32>
      %34 = math.rsqrt %33 : vector<1x1x128xf32>
      %35 = arith.mulf %29, %34 : vector<1x1x128xf32>
      %36 = arith.mulf %18, %35 : vector<1x1x128xf32>
      %37 = arith.subf %31, %36 : vector<1x1x128xf32>
      %38 = vector.broadcast %35 : vector<1x1x128xf32> to vector<1x8x128xf32>
      %39 = arith.mulf %14, %38 : vector<1x8x128xf32>
      %40 = vector.broadcast %37 : vector<1x1x128xf32> to vector<1x8x128xf32>
      %41 = arith.addf %39, %40 : vector<1x8x128xf32>
      %42 = vector.shape_cast %41 : vector<1x8x128xf32> to vector<8x128xf32>
      %c0_22 = arith.constant 0 : index
      %c0_23 = arith.constant 0 : index
      %43 = vector.load %arg6[%c0_22, %c0_23] : memref<8x128xf32, #tpu.memory_space<vmem>>, vector<8x128xf32>
      tpu.vector_store %arg6[%c0_22, %c0_23], %42 {strides = array<i32>} : memref<8x128xf32, #tpu.memory_space<vmem>>, vector<8x128xf32>,
    } else {
    }
    return
  }
  func.func @transform_0(%arg0: i32, %arg1: i32) -> (i32, i32) {
    %c0_i32 = arith.constant 0 : i32
    return %arg0, %arg1 : i32, i32
  }
  func.func @transform_1(%arg0: i32, %arg1: i32) -> (i32, i32) {
    %c0_i32 = arith.constant 0 : i32
    %c0_i32_0 = arith.constant 0 : i32
    return %arg1, %c0_i32 : i32, i32
  }
  func.func @transform_2(%arg0: i32, %arg1: i32) -> (i32, i32) {
    %c0_i32 = arith.constant 0 : i32
    %c0_i32_0 = arith.constant 0 : i32
    %c0_i32_1 = arith.constant 0 : i32
    return %c0_i32, %c0_i32_0 : i32, i32
  }
  func.func @transform_3(%arg0: i32, %arg1: i32) -> (i32, i32) {
    %c0_i32 = arith.constant 0 : i32
    %c0_i32_0 = arith.constant 0 : i32
    %c0_i32_1 = arith.constant 0 : i32
    return %c0_i32, %c0_i32_0 : i32, i32
  }
  func.func @transform_4(%arg0: i32, %arg1: i32) -> (i32, i32) {
    %c0_i32 = arith.constant 0 : i32
    %c0_i32_0 = arith.constant 0 : i32
    return %arg0, %c0_i32 : i32, i32
  }
}

module attributes {stable_mosaic.version = 11 : i64} {
  func.func @graph_s_kernel(%arg0: i32, %arg1: memref<32x32xf32, #tpu.memory_space<vmem>>, %arg2: memref<32x128xf32, #tpu.memory_space<vmem>>, %arg3: memref<1x32xf32, #tpu.memory_space<vmem>>, %arg4: memref<1x128xf32, #tpu.memory_space<vmem>>, %arg5: memref<1x128xf32, #tpu.memory_space<vmem>>, %arg6: memref<1x1xf32, #tpu.memory_space<vmem>>, %arg7: memref<32x128xbf16, #tpu.memory_space<vmem>>, %arg8: memref<32x1xf32, #tpu.memory_space<vmem>>, %arg9: memref<32x1xf32, #tpu.memory_space<vmem>>) attributes {dimension_semantics = [#tpu.dimension_semantics<parallel>], iteration_bounds = array<i64: 4>, scalar_prefetch = 0 : i64, scratch_operands = 0 : i64, tpu.core_type = #tpu.core_type<tc>, window_params = [{transform_indices = @transform_0, window_bounds = array<i64: 32, 32>}, {pipeline_mode = #tpu.pipeline_mode<synchronous>, transform_indices = @transform_1, window_bounds = array<i64: 32, 128>}, {pipeline_mode = #tpu.pipeline_mode<synchronous>, transform_indices = @transform_2, window_bounds = array<i64: 1, 32>}, {pipeline_mode = #tpu.pipeline_mode<synchronous>, transform_indices = @transform_3, window_bounds = array<i64: 1, 128>}, {pipeline_mode = #tpu.pipeline_mode<synchronous>, transform_indices = @transform_4, window_bounds = array<i64: 1, 128>}, {pipeline_mode = #tpu.pipeline_mode<synchronous>, transform_indices = @transform_5, window_bounds = array<i64: 1, 1>}, {transform_indices = @transform_6, window_bounds = array<i64: 32, 128>}, {transform_indices = @transform_7, window_bounds = array<i64: 32, 1>}, {transform_indices = @transform_8, window_bounds = array<i64: 32, 1>}]} {
    %c0 = arith.constant 0 : index
    %c0_0 = arith.constant 0 : index
    %0 = vector.load %arg1[%c0, %c0_0] : memref<32x32xf32, #tpu.memory_space<vmem>>, vector<32x32xf32>
    %c0_1 = arith.constant 0 : index
    %c0_2 = arith.constant 0 : index
    %1 = vector.load %arg2[%c0_1, %c0_2] : memref<32x128xf32, #tpu.memory_space<vmem>>, vector<32x128xf32>
    %c0_3 = arith.constant 0 : index
    %c0_4 = arith.constant 0 : index
    %2 = vector.load %arg3[%c0_3, %c0_4] : memref<1x32xf32, #tpu.memory_space<vmem>>, vector<1x32xf32>
    %3 = vector.broadcast %2 : vector<1x32xf32> to vector<32x32xf32>
    %4 = arith.mulf %0, %3 : vector<32x32xf32>
    %5 = arith.mulf %4, %0 : vector<32x32xf32>
    %cst = arith.constant dense<0.000000e+00> : vector<32xf32>
    %6 = vector.multi_reduction <add>, %5, %cst [1] : vector<32x32xf32> to vector<32xf32>
    %7 = vector.shape_cast %6 : vector<32xf32> to vector<32x1xf32>
    %8 = arith.mulf %0, %0 : vector<32x32xf32>
    %cst_5 = arith.constant dense<0.000000e+00> : vector<32xf32>
    %9 = vector.multi_reduction <add>, %8, %cst_5 [1] : vector<32x32xf32> to vector<32xf32>
    %10 = vector.shape_cast %9 : vector<32xf32> to vector<32x1xf32>
    %cst_6 = arith.constant dense<0.000000e+00> : vector<32x128xf32>
    %11 = tpu.matmul %4, %1, %cst_6 {dimension_numbers = #tpu.dot_dimension_numbers<[1], [0], [0], [1], [0, 0, 1, 1], [], []>} : vector<32x32xf32>, vector<32x128xf32>, vector<32x128xf32> -> vector<32x128xf32>
    %cst_7 = arith.constant dense<0.000000e+00> : vector<32x128xf32>
    %12 = tpu.matmul %0, %1, %cst_7 {dimension_numbers = #tpu.dot_dimension_numbers<[1], [0], [0], [1], [0, 0, 1, 1], [], []>} : vector<32x32xf32>, vector<32x128xf32>, vector<32x128xf32> -> vector<32x128xf32>
    %c0_8 = arith.constant 0 : index
    %c0_9 = arith.constant 0 : index
    %13 = vector.load %arg4[%c0_8, %c0_9] : memref<1x128xf32, #tpu.memory_space<vmem>>, vector<1x128xf32>
    %14 = vector.broadcast %7 : vector<32x1xf32> to vector<32x128xf32>
    %15 = vector.broadcast %13 : vector<1x128xf32> to vector<32x128xf32>
    %16 = arith.addf %14, %15 : vector<32x128xf32>
    %cst_10 = arith.constant 2.000000e+00 : f32
    %17 = vector.broadcast %cst_10 : f32 to vector<32x128xf32>
    %18 = arith.mulf %17, %11 : vector<32x128xf32>
    %19 = arith.subf %16, %18 : vector<32x128xf32>
    %c0_11 = arith.constant 0 : index
    %c0_12 = arith.constant 0 : index
    %20 = vector.load %arg6[%c0_11, %c0_12] : memref<1x1xf32, #tpu.memory_space<vmem>>, vector<1x1xf32>
    %21 = vector.broadcast %20 : vector<1x1xf32> to vector<32x128xf32>
    %22 = arith.addf %19, %21 : vector<32x128xf32>
    %cst_13 = arith.constant 0.000000e+00 : f32
    %23 = vector.broadcast %cst_13 : f32 to vector<32x128xf32>
    %24 = arith.maximumf %22, %23 : vector<32x128xf32>
    %25 = tpu.iota {dimensions = array<i32: 1>} : vector<32x128xi32>
    %c16_i32 = arith.constant 16 : i32
    %26 = vector.broadcast %c16_i32 : i32 to vector<32x128xi32>
    %27 = arith.cmpi slt, %25, %26 : vector<32x128xi32>
    %cst_14 = arith.constant 0xFF800000 : f32
    %28 = vector.broadcast %cst_14 : f32 to vector<32x128xf32>
    %29 = arith.select %27, %24, %28 : vector<32x128xi1>, vector<32x128xf32>
    %cst_15 = arith.constant dense<0xFF800000> : vector<32xf32>
    %30 = vector.multi_reduction <maximumf>, %29, %cst_15 [1] : vector<32x128xf32> to vector<32xf32>
    %31 = vector.shape_cast %30 : vector<32xf32> to vector<32x1xf32>
    %cst_16 = arith.constant 0xFF800000 : f32
    %c0_i32 = arith.constant 0 : i32
    %32 = vector.broadcast %31 : vector<32x1xf32> to vector<32x128xf32>
    %33 = arith.cmpf olt, %29, %32 : vector<32x128xf32>
    %34 = vector.broadcast %cst_16 : f32 to vector<32x128xf32>
    %35 = arith.select %33, %29, %34 : vector<32x128xi1>, vector<32x128xf32>
    %cst_17 = arith.constant dense<0xFF800000> : vector<32xf32>
    %36 = vector.multi_reduction <maximumf>, %35, %cst_17 [1] : vector<32x128xf32> to vector<32xf32>
    %37 = vector.shape_cast %36 : vector<32xf32> to vector<32x1xf32>
    %c1_i32 = arith.constant 1 : i32
    %38 = vector.broadcast %37 : vector<32x1xf32> to vector<32x128xf32>
    %39 = arith.cmpf olt, %29, %38 : vector<32x128xf32>
    %40 = vector.broadcast %cst_16 : f32 to vector<32x128xf32>
    %41 = arith.select %39, %29, %40 : vector<32x128xi1>, vector<32x128xf32>
    %cst_18 = arith.constant dense<0xFF800000> : vector<32xf32>
    %42 = vector.multi_reduction <maximumf>, %41, %cst_18 [1] : vector<32x128xf32> to vector<32xf32>
    %43 = vector.shape_cast %42 : vector<32xf32> to vector<32x1xf32>
    %c2_i32 = arith.constant 2 : i32
    %44 = vector.broadcast %43 : vector<32x1xf32> to vector<32x128xf32>
    %45 = arith.cmpf olt, %29, %44 : vector<32x128xf32>
    %46 = vector.broadcast %cst_16 : f32 to vector<32x128xf32>
    %47 = arith.select %45, %29, %46 : vector<32x128xi1>, vector<32x128xf32>
    %cst_19 = arith.constant dense<0xFF800000> : vector<32xf32>
    %48 = vector.multi_reduction <maximumf>, %47, %cst_19 [1] : vector<32x128xf32> to vector<32xf32>
    %49 = vector.shape_cast %48 : vector<32xf32> to vector<32x1xf32>
    %50 = vector.broadcast %49 : vector<32x1xf32> to vector<32x128xf32>
    %51 = arith.cmpf oge, %29, %50 : vector<32x128xf32>
    %52 = vector.broadcast %31 : vector<32x1xf32> to vector<32x128xf32>
    %53 = arith.subf %29, %52 : vector<32x128xf32>
    %54 = math.exp %53 : vector<32x128xf32>
    %cst_20 = arith.constant 0.000000e+00 : f32
    %55 = vector.broadcast %cst_20 : f32 to vector<32x128xf32>
    %56 = arith.select %51, %54, %55 : vector<32x128xi1>, vector<32x128xf32>
    %cst_21 = arith.constant dense<0.000000e+00> : vector<32xf32>
    %57 = vector.multi_reduction <add>, %56, %cst_21 [1] : vector<32x128xf32> to vector<32xf32>
    %58 = vector.shape_cast %57 : vector<32xf32> to vector<32x1xf32>
    %cst_22 = arith.constant 1.000000e+00 : f32
    %59 = vector.broadcast %cst_22 : f32 to vector<32x1xf32>
    %60 = arith.divf %59, %58 : vector<32x1xf32>
    %61 = vector.broadcast %60 : vector<32x1xf32> to vector<32x128xf32>
    %62 = arith.mulf %56, %61 : vector<32x128xf32>
    %63 = arith.truncf %62 : vector<32x128xf32> to vector<32x128xbf16>
    %c0_23 = arith.constant 0 : index
    %c0_24 = arith.constant 0 : index
    %64 = vector.load %arg7[%c0_23, %c0_24] : memref<32x128xbf16, #tpu.memory_space<vmem>>, vector<32x128xbf16>
    tpu.vector_store %arg7[%c0_23, %c0_24], %63 {strides = array<i32>} : memref<32x128xbf16, #tpu.memory_space<vmem>>, vector<32x128xbf16>,
    %c0_25 = arith.constant 0 : index
    %c0_26 = arith.constant 0 : index
    %65 = vector.load %arg5[%c0_25, %c0_26] : memref<1x128xf32, #tpu.memory_space<vmem>>, vector<1x128xf32>
    %66 = vector.broadcast %10 : vector<32x1xf32> to vector<32x128xf32>
    %67 = vector.broadcast %65 : vector<1x128xf32> to vector<32x128xf32>
    %68 = arith.addf %66, %67 : vector<32x128xf32>
    %cst_27 = arith.constant 2.000000e+00 : f32
    %69 = vector.broadcast %cst_27 : f32 to vector<32x128xf32>
    %70 = arith.mulf %69, %12 : vector<32x128xf32>
    %71 = arith.subf %68, %70 : vector<32x128xf32>
    %cst_28 = arith.constant 0.000000e+00 : f32
    %72 = vector.broadcast %cst_28 : f32 to vector<32x128xf32>
    %73 = arith.maximumf %71, %72 : vector<32x128xf32>
    %74 = arith.mulf %73, %62 : vector<32x128xf32>
    %cst_29 = arith.constant dense<0.000000e+00> : vector<32xf32>
    %75 = vector.multi_reduction <add>, %74, %cst_29 [1] : vector<32x128xf32> to vector<32xf32>
    %76 = vector.shape_cast %75 : vector<32xf32> to vector<32x1xf32>
    %c0_30 = arith.constant 0 : index
    %c0_31 = arith.constant 0 : index
    %77 = vector.load %arg8[%c0_30, %c0_31] : memref<32x1xf32, #tpu.memory_space<vmem>>, vector<32x1xf32>
    tpu.vector_store %arg8[%c0_30, %c0_31], %76 {strides = array<i32>} : memref<32x1xf32, #tpu.memory_space<vmem>>, vector<32x1xf32>,
    %cst_32 = arith.constant dense<0.000000e+00> : vector<32xf32>
    %78 = vector.multi_reduction <add>, %62, %cst_32 [1] : vector<32x128xf32> to vector<32xf32>
    %79 = vector.shape_cast %78 : vector<32xf32> to vector<32x1xf32>
    %c0_33 = arith.constant 0 : index
    %c0_34 = arith.constant 0 : index
    %80 = vector.load %arg9[%c0_33, %c0_34] : memref<32x1xf32, #tpu.memory_space<vmem>>, vector<32x1xf32>
    tpu.vector_store %arg9[%c0_33, %c0_34], %79 {strides = array<i32>} : memref<32x1xf32, #tpu.memory_space<vmem>>, vector<32x1xf32>,
    return
  }
  func.func @transform_0(%arg0: i32) -> (i32, i32) {
    %c0_i32 = arith.constant 0 : i32
    %c0_i32_0 = arith.constant 0 : i32
    return %arg0, %c0_i32 : i32, i32
  }
  func.func @transform_1(%arg0: i32) -> (i32, i32) {
    %c0_i32 = arith.constant 0 : i32
    %c0_i32_0 = arith.constant 0 : i32
    %c0_i32_1 = arith.constant 0 : i32
    return %c0_i32, %c0_i32_0 : i32, i32
  }
  func.func @transform_2(%arg0: i32) -> (i32, i32) {
    %c0_i32 = arith.constant 0 : i32
    %c0_i32_0 = arith.constant 0 : i32
    %c0_i32_1 = arith.constant 0 : i32
    return %c0_i32, %c0_i32_0 : i32, i32
  }
  func.func @transform_3(%arg0: i32) -> (i32, i32) {
    %c0_i32 = arith.constant 0 : i32
    %c0_i32_0 = arith.constant 0 : i32
    %c0_i32_1 = arith.constant 0 : i32
    return %c0_i32, %c0_i32_0 : i32, i32
  }
  func.func @transform_4(%arg0: i32) -> (i32, i32) {
    %c0_i32 = arith.constant 0 : i32
    %c0_i32_0 = arith.constant 0 : i32
    %c0_i32_1 = arith.constant 0 : i32
    return %c0_i32, %c0_i32_0 : i32, i32
  }
  func.func @transform_5(%arg0: i32) -> (i32, i32) {
    %c0_i32 = arith.constant 0 : i32
    %c0_i32_0 = arith.constant 0 : i32
    %c0_i32_1 = arith.constant 0 : i32
    return %c0_i32, %c0_i32_0 : i32, i32
  }
  func.func @transform_6(%arg0: i32) -> (i32, i32) {
    %c0_i32 = arith.constant 0 : i32
    %c0_i32_0 = arith.constant 0 : i32
    return %arg0, %c0_i32 : i32, i32
  }
  func.func @transform_7(%arg0: i32) -> (i32, i32) {
    %c0_i32 = arith.constant 0 : i32
    %c0_i32_0 = arith.constant 0 : i32
    return %arg0, %c0_i32 : i32, i32
  }
  func.func @transform_8(%arg0: i32) -> (i32, i32) {
    %c0_i32 = arith.constant 0 : i32
    %c0_i32_0 = arith.constant 0 : i32
    return %arg0, %c0_i32 : i32, i32
  }
}

</mosaic_0001>

<llo_original>
// kernel: glcn_forward.3
$region0: #{glcn_forward.3}
  #allocation0 [shape = 'u32[]', space=smem, size = 0x4, offset = 0x4, fixed_abs, tag = 'smem constant byte address 0x4 - core index']
  #allocation1 [shape = 'u32[144,128]{1,0:T(1,128)}', space=vmem, size = 0x12000, scoped, tag = 'internal scratch']
  #allocation2 [shape = 'f32[1,1]{1,0:T(1,128)S(1)}', space=vmem, size = 0x200, scoped, tag = 'scoped memory for glcn_forward.3']
  %s0 = inlined_call_operand.vmem [shape: f32[128,32], index: 0, kind: input, shape index: {}]
  %s1 = inlined_call_operand.vmem [shape: f32[32,128], index: 1, kind: input, shape index: {}]
  %s2 = inlined_call_operand.vmem [shape: f32[1,32], index: 2, kind: input, shape index: {}]
  %s3 = inlined_call_operand.vmem [shape: f32[1,128], index: 3, kind: input, shape index: {}]
  %s4 = inlined_call_operand.vmem [shape: f32[1,128], index: 4, kind: input, shape index: {}]
  %s5 = inlined_call_operand.<no memory space> [shape: f32[1,1], index: 5, kind: input, shape index: {}]
  %s6 = inlined_call_operand.vmem [shape: bf16[128,128], index: 6, kind: output, shape index: {0}]
  %s7 = inlined_call_operand.vmem [shape: f32[128,1], index: 7, kind: output, shape index: {1}]
  %s8 = inlined_call_operand.vmem [shape: f32[128,1], index: 8, kind: output, shape index: {2}]
  %9 = xla_tuple %s6, %s7, %s8
  %s10 = sld [smem:[#allocation0]]
  $region73: #{glcn_forward.3} parent=0
    _
  %s12 = ssub.s32 1, %s10
  %s13 = scalar_select 0, %s12, %s10
  %v14 = vstv %s5
  %15 = vst [vmem:[#allocation2] sm:$0x1] %v14
  loop: start=0, step=1, limit=6
  $region2: #{glcn_forward.3} parent=0 // loop_pre_header
    _
  $region3: #{glcn_forward.3} parent=0 // loop_header
    %s17 = sphi 0, %s21
    %p18 = scmp.ge.s32.totalorder %s17, 6
    %s27 = sphi 0, %s29
    %s30 = sphi 0, %s27
    %s31 = sphi 0, %s30
    %s47 = sphi 0, %s31
    %s51 = sphi 0, %s51
    %s53 = sphi 0, %s51
    %s54 = sphi 0, %s53
    %s68 = sphi 0, %s54
    %s72 = sphi 0, %s72
    %s74 = sphi 0, %s72
    %s75 = sphi 0, %s74
    %s89 = sphi 0, %s75
    %s93 = sphi 0, %s93
    %s95 = sphi 0, %s93
    %s96 = sphi 0, %s95
    %s110 = sphi 0, %s96
    %s114 = sphi 0, %s114
    %s116 = sphi 0, %s114
    %s117 = sphi 0, %s116
    %s131 = sphi 0, %s117
    %s135 = sphi 0, %s135
    %s137 = sphi 0, %s135
    %s138 = sphi 0, %s137
    %s152 = sphi 0, %s138
    %s158 = sphi 0, %s160
    %s161 = sphi 0, %s158
    %s162 = sphi 0, %s161
    %s178 = sphi 0, %s162
    %s184 = sphi 0, %s186
    %s187 = sphi 0, %s184
    %s188 = sphi 0, %s187
    %s204 = sphi 0, %s188
    %s210 = sphi 0, %s212
    %s213 = sphi 0, %s210
    %s214 = sphi 0, %s213
    %s230 = sphi 0, %s214
  $region4: #{glcn_forward.3} parent=0 // loop_header_branch
    %20 = sbr.rel (%p18) target = $region8
  $region5: #{glcn_forward.3} parent=0 // loop_body
    %s22 = ssub.s32 %s17, 1
    %s23 = ssub.s32 %s17, 2
    %s24 = sadd.s32 %s17, 1
    %s25 = ssub.s32 %s17, %s24
    %p26 = scmp.eq.s32.totalorder %s25, 0
    %s28 = sadd.s32 %s27, 1
    %s29 = scalar_select %p26, %s27, %s28
    %p32 = pneg %p26
    %p33 = scmp.eq.s32.totalorder %s17, 3
    %p34 = por %p32, %p33
    %p35 = scmp.ne.s32.totalorder %s27, %s30
    %p36 = scmp.eq.s32.totalorder %s17, 0
    %p37 = por %p35, %p36
    %p38 = scmp.ne.s32.totalorder %s27, %s30
    %p39 = scmp.eq.s32.totalorder %s22, 3
    %p40 = por %p38, %p39
    %p41 = scmp.ne.s32.totalorder %s30, %s31
    %p42 = scmp.eq.s32.totalorder %s22, 0
    %p43 = por %p41, %p42
    %p44 = scmp.ne.s32.totalorder %s30, %s31
    %p45 = scmp.eq.s32.totalorder %s23, 3
    %p46 = por %p44, %p45
    %p48 = scmp.ne.s32.totalorder %s31, %s47
    %p49 = scmp.eq.s32.totalorder %s23, 0
    %p50 = por %p48, %p49
    %s52 = sadd.s32 %s51, 1
    %p55 = scmp.eq.s32.totalorder %s17, 3
    %p56 = scmp.ne.s32.totalorder %s51, %s53
    %p57 = scmp.eq.s32.totalorder %s17, 0
    %p58 = por %p56, %p57
    %p59 = scmp.ne.s32.totalorder %s51, %s53
    %p60 = scmp.eq.s32.totalorder %s22, 3
    %p61 = por %p59, %p60
    %p62 = scmp.ne.s32.totalorder %s53, %s54
    %p63 = scmp.eq.s32.totalorder %s22, 0
    %p64 = por %p62, %p63
    %p65 = scmp.ne.s32.totalorder %s53, %s54
    %p66 = scmp.eq.s32.totalorder %s23, 3
    %p67 = por %p65, %p66
    %p69 = scmp.ne.s32.totalorder %s54, %s68
    %p70 = scmp.eq.s32.totalorder %s23, 0
    %p71 = por %p69, %p70
    %s73 = sadd.s32 %s72, 1
    %p76 = scmp.eq.s32.totalorder %s17, 3
    %p77 = scmp.ne.s32.totalorder %s72, %s74
    %p78 = scmp.eq.s32.totalorder %s17, 0
    %p79 = por %p77, %p78
    %p80 = scmp.ne.s32.totalorder %s72, %s74
    %p81 = scmp.eq.s32.totalorder %s22, 3
    %p82 = por %p80, %p81
    %p83 = scmp.ne.s32.totalorder %s74, %s75
    %p84 = scmp.eq.s32.totalorder %s22, 0
    %p85 = por %p83, %p84
    %p86 = scmp.ne.s32.totalorder %s74, %s75
    %p87 = scmp.eq.s32.totalorder %s23, 3
    %p88 = por %p86, %p87
    %p90 = scmp.ne.s32.totalorder %s75, %s89
    %p91 = scmp.eq.s32.totalorder %s23, 0
    %p92 = por %p90, %p91
    %s94 = sadd.s32 %s93, 1
    %p97 = scmp.eq.s32.totalorder %s17, 3
    %p98 = scmp.ne.s32.totalorder %s93, %s95
    %p99 = scmp.eq.s32.totalorder %s17, 0
    %p100 = por %p98, %p99
    %p101 = scmp.ne.s32.totalorder %s93, %s95
    %p102 = scmp.eq.s32.totalorder %s22, 3
    %p103 = por %p101, %p102
    %p104 = scmp.ne.s32.totalorder %s95, %s96
    %p105 = scmp.eq.s32.totalorder %s22, 0
    %p106 = por %p104, %p105
    %p107 = scmp.ne.s32.totalorder %s95, %s96
    %p108 = scmp.eq.s32.totalorder %s23, 3
    %p109 = por %p107, %p108
    %p111 = scmp.ne.s32.totalorder %s96, %s110
    %p112 = scmp.eq.s32.totalorder %s23, 0
    %p113 = por %p111, %p112
    %s115 = sadd.s32 %s114, 1
    %p118 = scmp.eq.s32.totalorder %s17, 3
    %p119 = scmp.ne.s32.totalorder %s114, %s116
    %p120 = scmp.eq.s32.totalorder %s17, 0
    %p121 = por %p119, %p120
    %p122 = scmp.ne.s32.totalorder %s114, %s116
    %p123 = scmp.eq.s32.totalorder %s22, 3
    %p124 = por %p122, %p123
    %p125 = scmp.ne.s32.totalorder %s116, %s117
    %p126 = scmp.eq.s32.totalorder %s22, 0
    %p127 = por %p125, %p126
    %p128 = scmp.ne.s32.totalorder %s116, %s117
    %p129 = scmp.eq.s32.totalorder %s23, 3
    %p130 = por %p128, %p129
    %p132 = scmp.ne.s32.totalorder %s117, %s131
    %p133 = scmp.eq.s32.totalorder %s23, 0
    %p134 = por %p132, %p133
    %s136 = sadd.s32 %s135, 1
    %p139 = scmp.eq.s32.totalorder %s17, 3
    %p140 = scmp.ne.s32.totalorder %s135, %s137
    %p141 = scmp.eq.s32.totalorder %s17, 0
    %p142 = por %p140, %p141
    %p143 = scmp.ne.s32.totalorder %s135, %s137
    %p144 = scmp.eq.s32.totalorder %s22, 3
    %p145 = por %p143, %p144
    %p146 = scmp.ne.s32.totalorder %s137, %s138
    %p147 = scmp.eq.s32.totalorder %s22, 0
    %p148 = por %p146, %p147
    %p149 = scmp.ne.s32.totalorder %s137, %s138
    %p150 = scmp.eq.s32.totalorder %s23, 3
    %p151 = por %p149, %p150
    %p153 = scmp.ne.s32.totalorder %s138, %s152
    %p154 = scmp.eq.s32.totalorder %s23, 0
    %p155 = por %p153, %p154
    %s156 = ssub.s32 %s17, %s24
    %p157 = scmp.eq.s32.totalorder %s156, 0
    %s159 = sadd.s32 %s158, 1
    %s160 = scalar_select %p157, %s158, %s159
    %p163 = pneg %p157
    %p164 = scmp.eq.s32.totalorder %s17, 3
    %p165 = por %p163, %p164
    %p166 = scmp.ne.s32.totalorder %s158, %s161
    %p167 = scmp.eq.s32.totalorder %s17, 0
    %p168 = por %p166, %p167
    %p169 = scmp.ne.s32.totalorder %s158, %s161
    %p170 = scmp.eq.s32.totalorder %s22, 3
    %p171 = por %p169, %p170
    %p172 = scmp.ne.s32.totalorder %s161, %s162
    %p173 = scmp.eq.s32.totalorder %s22, 0
    %p174 = por %p172, %p173
    %p175 = scmp.ne.s32.totalorder %s161, %s162
    %p176 = scmp.eq.s32.totalorder %s23, 3
    %p177 = por %p175, %p176
    %p179 = scmp.ne.s32.totalorder %s162, %s178
    %p180 = scmp.eq.s32.totalorder %s23, 0
    %p181 = por %p179, %p180
    %s182 = ssub.s32 %s17, %s24
    %p183 = scmp.eq.s32.totalorder %s182, 0
    %s185 = sadd.s32 %s184, 1
    %s186 = scalar_select %p183, %s184, %s185
    %p189 = pneg %p183
    %p190 = scmp.eq.s32.totalorder %s17, 3
    %p191 = por %p189, %p190
    %p192 = scmp.ne.s32.totalorder %s184, %s187
    %p193 = scmp.eq.s32.totalorder %s17, 0
    %p194 = por %p192, %p193
    %p195 = scmp.ne.s32.totalorder %s184, %s187
    %p196 = scmp.eq.s32.totalorder %s22, 3
    %p197 = por %p195, %p196
    %p198 = scmp.ne.s32.totalorder %s187, %s188
    %p199 = scmp.eq.s32.totalorder %s22, 0
    %p200 = por %p198, %p199
    %p201 = scmp.ne.s32.totalorder %s187, %s188
    %p202 = scmp.eq.s32.totalorder %s23, 3
    %p203 = por %p201, %p202
    %p205 = scmp.ne.s32.totalorder %s188, %s204
    %p206 = scmp.eq.s32.totalorder %s23, 0
    %p207 = por %p205, %p206
    %s208 = ssub.s32 %s17, %s24
    %p209 = scmp.eq.s32.totalorder %s208, 0
    %s211 = sadd.s32 %s210, 1
    %s212 = scalar_select %p209, %s210, %s211
    %p215 = pneg %p209
    %p216 = scmp.eq.s32.totalorder %s17, 3
    %p217 = por %p215, %p216
    %p218 = scmp.ne.s32.totalorder %s210, %s213
    %p219 = scmp.eq.s32.totalorder %s17, 0
    %p220 = por %p218, %p219
    %p221 = scmp.ne.s32.totalorder %s210, %s213
    %p222 = scmp.eq.s32.totalorder %s22, 3
    %p223 = por %p221, %p222
    %p224 = scmp.ne.s32.totalorder %s213, %s214
    %p225 = scmp.eq.s32.totalorder %s22, 0
    %p226 = por %p224, %p225
    %p227 = scmp.ne.s32.totalorder %s213, %s214
    %p228 = scmp.eq.s32.totalorder %s23, 3
    %p229 = por %p227, %p228
    %p231 = scmp.ne.s32.totalorder %s214, %s230
    %p232 = scmp.eq.s32.totalorder %s23, 0
    %p233 = por %p231, %p232
    %p234 = scmp.le.s32.totalorder 1, %s17
    %p235 = scmp.lt.s32.totalorder %s17, 5
    %p236 = pnand %p234, %p235
    %p237 = pneg %p236
    // Predicated region
    $region9: #{glcn_forward.3} parent=5 // pred_check
      _
    $region10: #{glcn_forward.3} parent=5 // pred_check_branch
      %239 = sbr.rel (%p236) target = $region12
    $region11: #{glcn_forward.3} parent=5 // pred_region
      %s240 = ssub.s32 %s17, 1
      // Predicated region
      $region13: #{glcn_forward.3} parent=11 // pred_check
        %p241 = pneg %p64
      $region14: #{glcn_forward.3} parent=11 // pred_check_branch
        %243 = sbr.rel (%p241) target = $region16
      $region15: #{glcn_forward.3} parent=11 // pred_region
        _
      $region16: #{glcn_forward.3} parent=11 // pred_fallthru
        _
      // Predicated region
      $region17: #{glcn_forward.3} parent=11 // pred_check
        %p244 = pneg %p85
      $region18: #{glcn_forward.3} parent=11 // pred_check_branch
        %246 = sbr.rel (%p244) target = $region20
      $region19: #{glcn_forward.3} parent=11 // pred_region
        _
      $region20: #{glcn_forward.3} parent=11 // pred_fallthru
        _
      // Predicated region
      $region21: #{glcn_forward.3} parent=11 // pred_check
        %p247 = pneg %p106
      $region22: #{glcn_forward.3} parent=11 // pred_check_branch
        %249 = sbr.rel (%p247) target = $region24
      $region23: #{glcn_forward.3} parent=11 // pred_region
        _
      $region24: #{glcn_forward.3} parent=11 // pred_fallthru
        _
      // Predicated region
      $region25: #{glcn_forward.3} parent=11 // pred_check
        %p250 = pneg %p127
      $region26: #{glcn_forward.3} parent=11 // pred_check_branch
        %252 = sbr.rel (%p250) target = $region28
      $region27: #{glcn_forward.3} parent=11 // pred_region
        _
      $region28: #{glcn_forward.3} parent=11 // pred_fallthru
        _
      // Predicated region
      $region29: #{glcn_forward.3} parent=11 // pred_check
        %p253 = pneg %p148
      $region30: #{glcn_forward.3} parent=11 // pred_check_branch
        %255 = sbr.rel (%p253) target = $region32
      $region31: #{glcn_forward.3} parent=11 // pred_region
        _
      $region32: #{glcn_forward.3} parent=11 // pred_fallthru
        _
    $region12: #{glcn_forward.3} parent=5 // pred_fallthru
      _
    %p256 = scmp.lt.s32.totalorder %s17, 4
    // Predicated region
    $region33: #{glcn_forward.3} parent=5 // pred_check
      %p257 = pneg %p256
    $region34: #{glcn_forward.3} parent=5 // pred_check_branch
      %259 = sbr.rel (%p257) target = $region36
    $region35: #{glcn_forward.3} parent=5 // pred_region
      // Predicated region
      $region37: #{glcn_forward.3} parent=35 // pred_check
        %p260 = pneg %p37
      $region38: #{glcn_forward.3} parent=35 // pred_check_branch
        %262 = sbr.rel (%p260) target = $region40
      $region39: #{glcn_forward.3} parent=35 // pred_region
        %s263 = smul.u32 4, %s17
        %p264 = scmp.lt.s32.totalorder %s263, 15
        %s265 = scalar_select %p264, %s263, 15
        %s266 = smul.addr %s265, 8
        %s267 = scalar_lea.vmem %s0, %s266
        %s268 = smul.u32 4, %s17
      $region40: #{glcn_forward.3} parent=35 // pred_fallthru
        _
    $region36: #{glcn_forward.3} parent=5 // pred_fallthru
      _
    %p269 = scmp.le.s32.totalorder 1, %s17
    %p270 = scmp.lt.s32.totalorder %s17, 5
    %p271 = pnand %p269, %p270
    %p272 = pneg %p271
    // Predicated region
    $region41: #{glcn_forward.3} parent=5 // pred_check
      _
    $region42: #{glcn_forward.3} parent=5 // pred_check_branch
      %274 = sbr.rel (%p271) target = $region44
    $region43: #{glcn_forward.3} parent=5 // pred_region
      %s275 = ssub.s32 %s17, 1
      %s276 = smul.u32 4, %s22
      %p277 = scmp.lt.s32.totalorder %s276, 15
      %s278 = scalar_select %p277, %s276, 15
      %s279 = smul.addr %s278, 8
      %s280 = scalar_lea.vmem %s0, %s279
      %p281 = pneg %p43
      %p282 = pneg %p40
      %p283 = pneg %p64
      %p284 = pneg %p61
      %p285 = pneg %p85
      %p286 = pneg %p82
      %p287 = pneg %p106
      %p288 = pneg %p103
      %p289 = pneg %p127
      %p290 = pneg %p124
      %p291 = pneg %p148
      %p292 = pneg %p145
      %p293 = pneg %p174
      %p294 = pneg %p171
      %s295 = smul.u32 4, %s22
      %p296 = scmp.lt.s32.totalorder %s295, 15
      %s297 = scalar_select %p296, %s295, 15
      %s298 = smul.addr %s297, 4
      %s299 = scalar_lea.vmem %s6, %s298
      %p300 = pneg %p200
      %p301 = pneg %p197
      %s302 = smul.u32 4, %s22
      %p303 = scmp.lt.s32.totalorder %s302, 15
      %s304 = scalar_select %p303, %s302, 15
      %s305 = smul.addr %s304, 8
      %s306 = scalar_lea.vmem %s7, %s305
      %p307 = pneg %p226
      %p308 = pneg %p223
      %s309 = smul.u32 4, %s22
      %p310 = scmp.lt.s32.totalorder %s309, 15
      %s311 = scalar_select %p310, %s309, 15
      %s312 = smul.addr %s311, 8
      %s313 = scalar_lea.vmem %s8, %s312
      %s314 = smul.u32 4, %s22
      %p315 = scmp.lt.s32.totalorder %s314, 15
      %s316 = scalar_select %p315, %s314, 15
      %s317 = smul.addr %s316, 8
      %s318 = scalar_lea.vmem %s0, %s317
      %s319 = smul.u32 4, %s22
      %s320 = smul.u32 4, %s22
      %p321 = scmp.lt.s32.totalorder %s320, 15
      %s322 = scalar_select %p321, %s320, 15
      %s323 = smul.addr %s322, 4
      %s324 = scalar_lea.vmem %s6, %s323
      %s325 = smul.u32 4, %s22
      %s326 = smul.u32 4, %s22
      %p327 = scmp.lt.s32.totalorder %s326, 15
      %s328 = scalar_select %p327, %s326, 15
      %s329 = smul.addr %s328, 8
      %s330 = scalar_lea.vmem %s7, %s329
      %s331 = smul.u32 4, %s22
      %s332 = smul.u32 4, %s22
      %p333 = scmp.lt.s32.totalorder %s332, 15
      %s334 = scalar_select %p333, %s332, 15
      %s335 = smul.addr %s334, 8
      %s336 = scalar_lea.vmem %s8, %s335
      %s337 = smul.u32 4, %s22
      %v338 = vld [vmem:[%s318] sm:$0xff]
      %v339 = vld [vmem:[%s318 + $0x8] sm:$0xff]
      %v340 = vld [vmem:[%s318 + $0x10] sm:$0xff]
      %v341 = vld [vmem:[%s318 + $0x18] sm:$0xff]
      %v342 = vld [vmem:[%s1] sm:$0xff]
      %v343 = vld [vmem:[%s1 + $0x8] sm:$0xff]
      %v344 = vld [vmem:[%s1 + $0x10] sm:$0xff]
      %v345 = vld [vmem:[%s1 + $0x18] sm:$0xff]
      %v346 = vld [vmem:[%s2] sm:$0x1]
      %v348 = vlaneseq
      %v349 = vshrl.u32 %v348, 7
      %v350 = vsub.s32 0, %v349
      %v351 = vrot.slane %v346, %v350
      %v353 = vmul.f32 %v338, %v351
      %v354 = vmul.f32 %v339, %v351
      %v355 = vmul.f32 %v340, %v351
      %v356 = vmul.f32 %v341, %v351
      %v357 = vmul.f32 %v353, %v338
      %v358 = vmul.f32 %v354, %v339
      %v359 = vmul.f32 %v355, %v340
      %v360 = vmul.f32 %v356, %v341
      %vm361 = vcmask 261120
      %v362 = vsel %vm361, %v357, 0.0
      %363 = vadd.xlane.f32.xlu0 %v362
      %v364 = vpop.xlane.xlu0 %363
      %v365 = vsel %vm361, %v358, 0.0
      %366 = vadd.xlane.f32.xlu0 %v365
      %v367 = vpop.xlane.xlu0 %366
      %v368 = vsel %vm361, %v359, 0.0
      %369 = vadd.xlane.f32.xlu0 %v368
      %v370 = vpop.xlane.xlu0 %369
      %v371 = vsel %vm361, %v360, 0.0
      %372 = vadd.xlane.f32.xlu0 %v371
      %v373 = vpop.xlane.xlu0 %372
      %v374 = vmul.f32 %v338, %v338
      %v375 = vmul.f32 %v339, %v339
      %v376 = vmul.f32 %v340, %v340
      %v377 = vmul.f32 %v341, %v341
      %v378 = vsel %vm361, %v374, 0.0
      %379 = vadd.xlane.f32.xlu0 %v378
      %v380 = vpop.xlane.xlu0 %379
      %v381 = vsel %vm361, %v375, 0.0
      %382 = vadd.xlane.f32.xlu0 %v381
      %v383 = vpop.xlane.xlu0 %382
      %v384 = vsel %vm361, %v376, 0.0
      %385 = vadd.xlane.f32.xlu0 %v384
      %v386 = vpop.xlane.xlu0 %385
      %v387 = vsel %vm361, %v377, 0.0
      %388 = vadd.xlane.f32.xlu0 %v387
      %v389 = vpop.xlane.xlu0 %388
      %v391 = vsel %vm361, %v353, 0
      %v394 = vsel %vm361, %v354, 0
      %v397 = vsel %vm361, %v355, 0
      %v400 = vsel %vm361, %v356, 0
      %402 = vmatprep.subr.mxu0 0.0
      %403 = vmatpush1.msra.mxu0 0.0
      %404 = vmatprep.subr.mxu0 0.0
      %405 = vmatpush1.msra.mxu0 0.0
      %406 = vmatprep.subr.mxu0 0.0
      %407 = vmatpush1.msra.mxu0 0.0
      %408 = vmatprep.subr.mxu0 0.0
      %409 = vmatpush1.msra.mxu0 0.0
      %410 = vmatprep.subr.mxu0 0.0
      %411 = vmatpush1.msra.mxu0 0.0
      %412 = vmatprep.subr.mxu0 0.0
      %413 = vmatpush1.msra.mxu0 0.0
      %414 = vmatprep.subr.mxu0 0.0
      %415 = vmatpush1.msra.mxu0 0.0
      %416 = vmatprep.subr.mxu0 0.0
      %417 = vmatpush1.msra.mxu0 0.0
      %418 = vmatprep.subr.mxu0 0.0
      %419 = vmatpush1.msra.mxu0 0.0
      %420 = vmatprep.subr.mxu0 0.0
      %421 = vmatpush1.msra.mxu0 0.0
      %422 = vmatprep.subr.mxu0 0.0
      %423 = vmatpush1.msra.mxu0 0.0
      %424 = vmatprep.subr.mxu0 0.0
      %425 = vmatpush1.msra.mxu0 0.0
      %426 = vmatprep.subr.mxu0 0.0
      %427 = vmatpush1.msra.mxu0 %v345
      %428 = vmatprep.subr.mxu0 0.0
      %429 = vmatpush1.msra.mxu0 %v344
      %430 = vmatprep.subr.mxu0 0.0
      %431 = vmatpush1.msra.mxu0 %v343
      %432 = vmatprep.subr.mxu0 0.0
      %433 = vmatpush1.msra.mxu0 %v342
      %434 = vmatprep.subr.mxu0 0.0
      %435 = vmatpush2.msra.mxu0 0.0
      %436 = vmatprep.subr.mxu0 0.0
      %437 = vmatpush2.msra.mxu0 0.0
      %438 = vmatprep.subr.mxu0 0.0
      %439 = vmatpush2.msra.mxu0 0.0
      %440 = vmatprep.subr.mxu0 0.0
      %441 = vmatpush2.msra.mxu0 0.0
      %442 = vmatprep.subr.mxu0 0.0
      %443 = vmatpush2.msra.mxu0 0.0
      %444 = vmatprep.subr.mxu0 0.0
      %445 = vmatpush2.msra.mxu0 0.0
      %446 = vmatprep.subr.mxu0 0.0
      %447 = vmatpush2.msra.mxu0 0.0
      %448 = vmatprep.subr.mxu0 0.0
      %449 = vmatpush2.msra.mxu0 0.0
      %450 = vmatprep.subr.mxu0 0.0
      %451 = vmatpush2.msra.mxu0 0.0
      %452 = vmatprep.subr.mxu0 0.0
      %453 = vmatpush2.msra.mxu0 0.0
      %454 = vmatprep.subr.mxu0 0.0
      %455 = vmatpush2.msra.mxu0 0.0
      %456 = vmatprep.subr.mxu0 0.0
      %457 = vmatpush2.msra.mxu0 0.0
      %458 = vmatprep.subr.mxu0 0.0
      %459 = vmatpush2.msra.mxu0 0.0
      %460 = vmatprep.subr.mxu0 0.0
      %461 = vmatpush2.msra.mxu0 0.0
      %462 = vmatprep.subr.mxu0 0.0
      %463 = vmatpush2.msra.mxu0 0.0
      %464 = vmatprep.subr.mxu0 0.0
      %465 = vmatpush2.msra.mxu0 0.0
      %466 = vmatprep.mubr.f32.mxu0 0.0
      %467 = vmatmul.mubr.f32.gmra.mxu0 %v391
      %v468 = vpop.f32.mrf.mxu0
      %v469 = vadd.f32 0.0, %v468
      %v470 = vpop.f32.mrf.mxu0
      %471 = vmatprep.mubr.f32.mxu0 0.0
      %472 = vmatmul.mubr.f32.gmra.mxu0 %v394
      %v473 = vpop.f32.mrf.mxu0
      %v474 = vadd.f32 0.0, %v473
      %v475 = vpop.f32.mrf.mxu0
      %476 = vmatprep.mubr.f32.mxu0 0.0
      %477 = vmatmul.mubr.f32.gmra.mxu0 %v397
      %v478 = vpop.f32.mrf.mxu0
      %v479 = vadd.f32 0.0, %v478
      %v480 = vpop.f32.mrf.mxu0
      %481 = vmatprep.mubr.f32.mxu0 0.0
      %482 = vmatmul.mubr.f32.gmra.mxu0 %v400
      %v483 = vpop.f32.mrf.mxu0
      %v484 = vadd.f32 0.0, %v483
      %v485 = vpop.f32.mrf.mxu0
      %486 = vdwg.mxu0
      %v488 = vsel %vm361, %v338, 0
      %v491 = vsel %vm361, %v339, 0
      %v494 = vsel %vm361, %v340, 0
      %v497 = vsel %vm361, %v341, 0
      %499 = vmatprep.subr.mxu0 0.0
      %500 = vmatpush1.msra.mxu0 0.0
      %501 = vmatprep.subr.mxu0 0.0
      %502 = vmatpush1.msra.mxu0 0.0
      %503 = vmatprep.subr.mxu0 0.0
      %504 = vmatpush1.msra.mxu0 0.0
      %505 = vmatprep.subr.mxu0 0.0
      %506 = vmatpush1.msra.mxu0 0.0
      %507 = vmatprep.subr.mxu0 0.0
      %508 = vmatpush1.msra.mxu0 0.0
      %509 = vmatprep.subr.mxu0 0.0
      %510 = vmatpush1.msra.mxu0 0.0
      %511 = vmatprep.subr.mxu0 0.0
      %512 = vmatpush1.msra.mxu0 0.0
      %513 = vmatprep.subr.mxu0 0.0
      %514 = vmatpush1.msra.mxu0 0.0
      %515 = vmatprep.subr.mxu0 0.0
      %516 = vmatpush1.msra.mxu0 0.0
      %517 = vmatprep.subr.mxu0 0.0
      %518 = vmatpush1.msra.mxu0 0.0
      %519 = vmatprep.subr.mxu0 0.0
      %520 = vmatpush1.msra.mxu0 0.0
      %521 = vmatprep.subr.mxu0 0.0
      %522 = vmatpush1.msra.mxu0 0.0
      %523 = vmatprep.subr.mxu0 0.0
      %524 = vmatpush1.msra.mxu0 %v345
      %525 = vmatprep.subr.mxu0 0.0
      %526 = vmatpush1.msra.mxu0 %v344
      %527 = vmatprep.subr.mxu0 0.0
      %528 = vmatpush1.msra.mxu0 %v343
      %529 = vmatprep.subr.mxu0 0.0
      %530 = vmatpush1.msra.mxu0 %v342
      %531 = vmatprep.subr.mxu0 0.0
      %532 = vmatpush2.msra.mxu0 0.0
      %533 = vmatprep.subr.mxu0 0.0
      %534 = vmatpush2.msra.mxu0 0.0
      %535 = vmatprep.subr.mxu0 0.0
      %536 = vmatpush2.msra.mxu0 0.0
      %537 = vmatprep.subr.mxu0 0.0
      %538 = vmatpush2.msra.mxu0 0.0
      %539 = vmatprep.subr.mxu0 0.0
      %540 = vmatpush2.msra.mxu0 0.0
      %541 = vmatprep.subr.mxu0 0.0
      %542 = vmatpush2.msra.mxu0 0.0
      %543 = vmatprep.subr.mxu0 0.0
      %544 = vmatpush2.msra.mxu0 0.0
      %545 = vmatprep.subr.mxu0 0.0
      %546 = vmatpush2.msra.mxu0 0.0
      %547 = vmatprep.subr.mxu0 0.0
      %548 = vmatpush2.msra.mxu0 0.0
      %549 = vmatprep.subr.mxu0 0.0
      %550 = vmatpush2.msra.mxu0 0.0
      %551 = vmatprep.subr.mxu0 0.0
      %552 = vmatpush2.msra.mxu0 0.0
      %553 = vmatprep.subr.mxu0 0.0
      %554 = vmatpush2.msra.mxu0 0.0
      %555 = vmatprep.subr.mxu0 0.0
      %556 = vmatpush2.msra.mxu0 0.0
      %557 = vmatprep.subr.mxu0 0.0
      %558 = vmatpush2.msra.mxu0 0.0
      %559 = vmatprep.subr.mxu0 0.0
      %560 = vmatpush2.msra.mxu0 0.0
      %561 = vmatprep.subr.mxu0 0.0
      %562 = vmatpush2.msra.mxu0 0.0
      %563 = vmatprep.mubr.f32.mxu0 0.0
      %564 = vmatmul.mubr.f32.gmra.mxu0 %v488
      %v565 = vpop.f32.mrf.mxu0
      %v566 = vadd.f32 0.0, %v565
      %v567 = vpop.f32.mrf.mxu0
      %568 = vmatprep.mubr.f32.mxu0 0.0
      %569 = vmatmul.mubr.f32.gmra.mxu0 %v491
      %v570 = vpop.f32.mrf.mxu0
      %v571 = vadd.f32 0.0, %v570
      %v572 = vpop.f32.mrf.mxu0
      %573 = vmatprep.mubr.f32.mxu0 0.0
      %574 = vmatmul.mubr.f32.gmra.mxu0 %v494
      %v575 = vpop.f32.mrf.mxu0
      %v576 = vadd.f32 0.0, %v575
      %v577 = vpop.f32.mrf.mxu0
      %578 = vmatprep.mubr.f32.mxu0 0.0
      %579 = vmatmul.mubr.f32.gmra.mxu0 %v497
      %v580 = vpop.f32.mrf.mxu0
      %v581 = vadd.f32 0.0, %v580
      %v582 = vpop.f32.mrf.mxu0
      %583 = vdwg.mxu0
      %v584 = vld [vmem:[%s3] sm:$0x1]
      %v586 = vlaneseq
      %v587 = vshrl.u32 %v586, 7
      %v588 = vsub.s32 0, %v587
      %v589 = vrot.slane %v584, %v588
      %v591 = vadd.f32 %v364, %v589
      %v592 = vadd.f32 %v367, %v589
      %v593 = vadd.f32 %v370, %v589
      %v594 = vadd.f32 %v373, %v589
      %v595 = vmul.f32 %v469, 2.0
      %v596 = vmul.f32 %v474, 2.0
      %v597 = vmul.f32 %v479, 2.0
      %v598 = vmul.f32 %v484, 2.0
      %v599 = vsub.f32 %v591, %v595
      %v600 = vsub.f32 %v592, %v596
      %v601 = vsub.f32 %v593, %v597
      %v602 = vsub.f32 %v594, %v598
      %v603 = vld [vmem:[#allocation2] sm:$0x1]
      %v605 = vlaneseq
      %v606 = vshrl.u32 %v605, 7
      %v607 = vsub.s32 0, %v606
      %v608 = vrot.slane %v603, %v607
      %609 = vset.pattern.permute.xlu0 0
      %610 = vperm.xlu0 %609, %v608
      %v611 = vpop.permute.xlu0 %610
      %v613 = vadd.f32 %v599, %v611
      %v614 = vadd.f32 %v600, %v611
      %v615 = vadd.f32 %v601, %v611
      %v616 = vadd.f32 %v602, %v611
      %v617 = vmax.f32 %v613, 0.0
      %v618 = vmax.f32 %v614, 0.0
      %v619 = vmax.f32 %v615, 0.0
      %v620 = vmax.f32 %v616, 0.0
      %v621 = vlaneseq
      %v622 = vand.u32 %v621, 127
      %vm623 = vcmp.lt.s32.totalorder %v622, 16
      %v624 = vsel %vm623, %v617, -inf
      %v625 = vsel %vm623, %v618, -inf
      %v626 = vsel %vm623, %v619, -inf
      %v627 = vsel %vm623, %v620, -inf
      %628 = vmax.xlane.f32.xlu0 %v624
      %v629 = vpop.xlane.xlu0 %628
      %630 = vmax.xlane.f32.xlu0 %v625
      %v631 = vpop.xlane.xlu0 %630
      %632 = vmax.xlane.f32.xlu0 %v626
      %v633 = vpop.xlane.xlu0 %632
      %634 = vmax.xlane.f32.xlu0 %v627
      %v635 = vpop.xlane.xlu0 %634
      %vm636 = vcmp.lt.f32.partialorder %v624, %v629
      %vm637 = vcmp.lt.f32.partialorder %v625, %v631
      %vm638 = vcmp.lt.f32.partialorder %v626, %v633
      %vm639 = vcmp.lt.f32.partialorder %v627, %v635
      %v640 = vsel %vm636, %v624, -inf
      %v641 = vsel %vm637, %v625, -inf
      %v642 = vsel %vm638, %v626, -inf
      %v643 = vsel %vm639, %v627, -inf
      %644 = vmax.xlane.f32.xlu0 %v640
      %v645 = vpop.xlane.xlu0 %644
      %646 = vmax.xlane.f32.xlu0 %v641
      %v647 = vpop.xlane.xlu0 %646
      %648 = vmax.xlane.f32.xlu0 %v642
      %v649 = vpop.xlane.xlu0 %648
      %650 = vmax.xlane.f32.xlu0 %v643
      %v651 = vpop.xlane.xlu0 %650
      %vm652 = vcmp.lt.f32.partialorder %v624, %v645
      %vm653 = vcmp.lt.f32.partialorder %v625, %v647
      %vm654 = vcmp.lt.f32.partialorder %v626, %v649
      %vm655 = vcmp.lt.f32.partialorder %v627, %v651
      %v656 = vsel %vm652, %v624, -inf
      %v657 = vsel %vm653, %v625, -inf
      %v658 = vsel %vm654, %v626, -inf
      %v659 = vsel %vm655, %v627, -inf
      %660 = vmax.xlane.f32.xlu0 %v656
      %v661 = vpop.xlane.xlu0 %660
      %662 = vmax.xlane.f32.xlu0 %v657
      %v663 = vpop.xlane.xlu0 %662
      %664 = vmax.xlane.f32.xlu0 %v658
      %v665 = vpop.xlane.xlu0 %664
      %666 = vmax.xlane.f32.xlu0 %v659
      %v667 = vpop.xlane.xlu0 %666
      %vm668 = vcmp.lt.f32.partialorder %v624, %v661
      %vm669 = vcmp.lt.f32.partialorder %v625, %v663
      %vm670 = vcmp.lt.f32.partialorder %v626, %v665
      %vm671 = vcmp.lt.f32.partialorder %v627, %v667
      %v672 = vsel %vm668, %v624, -inf
      %v673 = vsel %vm669, %v625, -inf
      %v674 = vsel %vm670, %v626, -inf
      %v675 = vsel %vm671, %v627, -inf
      %676 = vmax.xlane.f32.xlu0 %v672
      %v677 = vpop.xlane.xlu0 %676
      %678 = vmax.xlane.f32.xlu0 %v673
      %v679 = vpop.xlane.xlu0 %678
      %680 = vmax.xlane.f32.xlu0 %v674
      %v681 = vpop.xlane.xlu0 %680
      %682 = vmax.xlane.f32.xlu0 %v675
      %v683 = vpop.xlane.xlu0 %682
      %vm684 = vcmp.ge.f32.partialorder %v624, %v677
      %vm685 = vcmp.ge.f32.partialorder %v625, %v679
      %vm686 = vcmp.ge.f32.partialorder %v626, %v681
      %vm687 = vcmp.ge.f32.partialorder %v627, %v683
      %v688 = vsub.f32 %v624, %v629
      %v689 = vsub.f32 %v625, %v631
      %v690 = vsub.f32 %v626, %v633
      %v691 = vsub.f32 %v627, %v635
      %v692 = vmul.f32 %v688, 1.442695
      %v693 = vpow.pop %v692
      %v694 = vmul.f32 %v689, 1.442695
      %v695 = vpow.pop %v694
      %v696 = vmul.f32 %v690, 1.442695
      %v697 = vpow.pop %v696
      %v698 = vmul.f32 %v691, 1.442695
      %v699 = vpow.pop %v698
      %v700 = vsel %vm684, %v693, 0.0
      %v701 = vsel %vm685, %v695, 0.0
      %v702 = vsel %vm686, %v697, 0.0
      %v703 = vsel %vm687, %v699, 0.0
      %704 = vadd.xlane.f32.xlu0 %v700
      %v705 = vpop.xlane.xlu0 %704
      %706 = vadd.xlane.f32.xlu0 %v701
      %v707 = vpop.xlane.xlu0 %706
      %708 = vadd.xlane.f32.xlu0 %v702
      %v709 = vpop.xlane.xlu0 %708
      %710 = vadd.xlane.f32.xlu0 %v703
      %v711 = vpop.xlane.xlu0 %710
      %v712 = vrcp.pop %v705
      %v713 = vmul.f32 1.0, %v712
      %v714 = vrcp.pop %v707
      %v715 = vmul.f32 1.0, %v714
      %v716 = vrcp.pop %v709
      %v717 = vmul.f32 1.0, %v716
      %v718 = vrcp.pop %v711
      %v719 = vmul.f32 1.0, %v718
      %v720 = vmul.f32 %v700, %v713
      %v721 = vmul.f32 %v701, %v715
      %v722 = vmul.f32 %v702, %v717
      %v723 = vmul.f32 %v703, %v719
      %v724 = vpack.c.bf16 %v721, %v720
      %v725 = vpack.c.bf16 %v723, %v722
      %v728 = vunpack.c.l.b16 %v724
      %v729 = vunpack.c.h.b16 %v724
      %v730 = vunpack.c.l.b16 %v725
      %v731 = vunpack.c.h.b16 %v725
      %v732 = vpack.c.b16 %v728, %v728
      %v733 = vpack.c.b16 %v729, %v729
      %v734 = vpack.c.b16 %v730, %v730
      %v735 = vpack.c.b16 %v731, %v731
      %740 = vst [vmem:[%s324] sm:$0xf] %v732
      %741 = vst [vmem:[%s324 + $0x4] sm:$0xf] %v733
      %742 = vst [vmem:[%s324 + $0x8] sm:$0xf] %v734
      %743 = vst [vmem:[%s324 + $0xc] sm:$0xf] %v735
      %v744 = vld [vmem:[%s4] sm:$0x1]
      %v746 = vlaneseq
      %v747 = vshrl.u32 %v746, 7
      %v748 = vsub.s32 0, %v747
      %v749 = vrot.slane %v744, %v748
      %v751 = vadd.f32 %v380, %v749
      %v752 = vadd.f32 %v383, %v749
      %v753 = vadd.f32 %v386, %v749
      %v754 = vadd.f32 %v389, %v749
      %v755 = vmul.f32 %v566, 2.0
      %v756 = vmul.f32 %v571, 2.0
      %v757 = vmul.f32 %v576, 2.0
      %v758 = vmul.f32 %v581, 2.0
      %v759 = vsub.f32 %v751, %v755
      %v760 = vsub.f32 %v752, %v756
      %v761 = vsub.f32 %v753, %v757
      %v762 = vsub.f32 %v754, %v758
      %v763 = vmax.f32 %v759, 0.0
      %v764 = vmax.f32 %v760, 0.0
      %v765 = vmax.f32 %v761, 0.0
      %v766 = vmax.f32 %v762, 0.0
      %v767 = vmul.f32 %v763, %v720
      %v768 = vmul.f32 %v764, %v721
      %v769 = vmul.f32 %v765, %v722
      %v770 = vmul.f32 %v766, %v723
      %771 = vadd.xlane.f32.xlu0 %v767
      %v772 = vpop.xlane.xlu0 %771
      %773 = vadd.xlane.f32.xlu0 %v768
      %v774 = vpop.xlane.xlu0 %773
      %775 = vadd.xlane.f32.xlu0 %v769
      %v776 = vpop.xlane.xlu0 %775
      %777 = vadd.xlane.f32.xlu0 %v770
      %v778 = vpop.xlane.xlu0 %777
      %vm779 = vcmask 7168
      %780 = vst.msk [vmem:[%s330] sm:$0xff] %vm779, %v772
      %781 = vst.msk [vmem:[%s330 + $0x8] sm:$0xff] %vm779, %v774
      %782 = vst.msk [vmem:[%s330 + $0x10] sm:$0xff] %vm779, %v776
      %783 = vst.msk [vmem:[%s330 + $0x18] sm:$0xff] %vm779, %v778
      %784 = vadd.xlane.f32.xlu0 %v720
      %v785 = vpop.xlane.xlu0 %784
      %786 = vadd.xlane.f32.xlu0 %v721
      %v787 = vpop.xlane.xlu0 %786
      %788 = vadd.xlane.f32.xlu0 %v722
      %v789 = vpop.xlane.xlu0 %788
      %790 = vadd.xlane.f32.xlu0 %v723
      %v791 = vpop.xlane.xlu0 %790
      %792 = vst.msk [vmem:[%s336] sm:$0xff] %vm779, %v785
      %793 = vst.msk [vmem:[%s336 + $0x8] sm:$0xff] %vm779, %v787
      %794 = vst.msk [vmem:[%s336 + $0x10] sm:$0xff] %vm779, %v789
      %795 = vst.msk [vmem:[%s336 + $0x18] sm:$0xff] %vm779, %v791
      %s796 = smul.u32 4, %s22
      %p797 = scmp.lt.s32.totalorder %s796, 15
      %s798 = scalar_select %p797, %s796, 15
      %s799 = smul.addr %s798, 4
      %s800 = scalar_lea.vmem %s6, %s799
      %s801 = smul.u32 4, %s22
      %p802 = scmp.lt.s32.totalorder %s801, 15
      %s803 = scalar_select %p802, %s801, 15
      %s804 = smul.addr %s803, 8
      %s805 = scalar_lea.vmem %s7, %s804
      %s806 = smul.u32 4, %s22
      %p807 = scmp.lt.s32.totalorder %s806, 15
      %s808 = scalar_select %p807, %s806, 15
      %s809 = smul.addr %s808, 8
      %s810 = scalar_lea.vmem %s8, %s809
      // Predicated region
      $region45: #{glcn_forward.3} parent=43 // pred_check
        %p811 = pneg %p171
      $region46: #{glcn_forward.3} parent=43 // pred_check_branch
        %813 = sbr.rel (%p811) target = $region48
      $region47: #{glcn_forward.3} parent=43 // pred_region
        %s814 = smul.u32 4, %s22
      $region48: #{glcn_forward.3} parent=43 // pred_fallthru
        _
      // Predicated region
      $region49: #{glcn_forward.3} parent=43 // pred_check
        %p815 = pneg %p197
      $region50: #{glcn_forward.3} parent=43 // pred_check_branch
        %817 = sbr.rel (%p815) target = $region52
      $region51: #{glcn_forward.3} parent=43 // pred_region
        %s818 = smul.u32 4, %s22
      $region52: #{glcn_forward.3} parent=43 // pred_fallthru
        _
      // Predicated region
      $region53: #{glcn_forward.3} parent=43 // pred_check
        %p819 = pneg %p223
      $region54: #{glcn_forward.3} parent=43 // pred_check_branch
        %821 = sbr.rel (%p819) target = $region56
      $region55: #{glcn_forward.3} parent=43 // pred_region
        %s822 = smul.u32 4, %s22
      $region56: #{glcn_forward.3} parent=43 // pred_fallthru
        _
    $region44: #{glcn_forward.3} parent=5 // pred_fallthru
      _
    %p823 = scmp.le.s32.totalorder 2, %s17
    // Predicated region
    $region57: #{glcn_forward.3} parent=5 // pred_check
      %p824 = pneg %p823
    $region58: #{glcn_forward.3} parent=5 // pred_check_branch
      %826 = sbr.rel (%p824) target = $region60
    $region59: #{glcn_forward.3} parent=5 // pred_region
      %s827 = ssub.s32 %s17, 2
      // Predicated region
      $region61: #{glcn_forward.3} parent=59 // pred_check
        %p828 = pneg %p177
      $region62: #{glcn_forward.3} parent=59 // pred_check_branch
        %830 = sbr.rel (%p828) target = $region64
      $region63: #{glcn_forward.3} parent=59 // pred_region
        %s831 = smul.u32 4, %s23
        %p832 = scmp.lt.s32.totalorder %s831, 15
        %s833 = scalar_select %p832, %s831, 15
        %s834 = smul.addr %s833, 4
        %s835 = scalar_lea.vmem %s6, %s834
      $region64: #{glcn_forward.3} parent=59 // pred_fallthru
        _
      // Predicated region
      $region65: #{glcn_forward.3} parent=59 // pred_check
        %p836 = pneg %p203
      $region66: #{glcn_forward.3} parent=59 // pred_check_branch
        %838 = sbr.rel (%p836) target = $region68
      $region67: #{glcn_forward.3} parent=59 // pred_region
        %s839 = smul.u32 4, %s23
        %p840 = scmp.lt.s32.totalorder %s839, 15
        %s841 = scalar_select %p840, %s839, 15
        %s842 = smul.addr %s841, 8
        %s843 = scalar_lea.vmem %s7, %s842
      $region68: #{glcn_forward.3} parent=59 // pred_fallthru
        _
      // Predicated region
      $region69: #{glcn_forward.3} parent=59 // pred_check
        %p844 = pneg %p229
      $region70: #{glcn_forward.3} parent=59 // pred_check_branch
        %846 = sbr.rel (%p844) target = $region72
      $region71: #{glcn_forward.3} parent=59 // pred_region
        %s847 = smul.u32 4, %s23
        %p848 = scmp.lt.s32.totalorder %s847, 15
        %s849 = scalar_select %p848, %s847, 15
        %s850 = smul.addr %s849, 8
        %s851 = scalar_lea.vmem %s8, %s850
      $region72: #{glcn_forward.3} parent=59 // pred_fallthru
        _
    $region60: #{glcn_forward.3} parent=5 // pred_fallthru
      _
  $region6: #{glcn_forward.3} parent=0 // loop_footer
    %s21 = sadd.s32 1, %s17
  $region7: #{glcn_forward.3} parent=0 // loop_footer_branch
    %16 = sbr.rel target = $region3
  $region8: #{glcn_forward.3} parent=0 // loop_exit
    _

// kernel: glcn_forward.2
$region0: #{glcn_forward.2}
  #allocation0 [shape = 'u32[]', space=smem, size = 0x4, offset = 0x4, fixed_abs, tag = 'smem constant byte address 0x4 - core index']
  #allocation1 [shape = 'u32[144,128]{1,0:T(1,128)}', space=vmem, size = 0x12000, scoped, tag = 'internal scratch']
  #allocation2 [shape = 'f32[8,128]{1,0:T(8,128)}', space=vmem, size = 0x1000, scoped, tag = 'scratch operand']
  %s0 = inlined_call_operand.vmem [shape: f32[16,1024], index: 0, kind: input, shape index: {}]
  %s1 = inlined_call_operand.vmem [shape: bf16[1024,128], index: 1, kind: input, shape index: {}]
  %s2 = inlined_call_operand.vmem [shape: f32[1,128], index: 2, kind: input, shape index: {}]
  %s3 = inlined_call_operand.vmem [shape: f32[1,128], index: 3, kind: input, shape index: {}]
  %s4 = inlined_call_operand.vmem [shape: f32[16,128], index: 4, kind: output, shape index: {}]
  %s5 = sld [smem:[#allocation0]]
  $region57: #{glcn_forward.2} parent=0
    _
  %s7 = ssub.s32 1, %s5
  %s8 = scalar_select 0, %s7, %s5
  loop: start=0, step=1, limit=4
  $region2: #{glcn_forward.2} parent=0 // loop_pre_header
    _
  $region3: #{glcn_forward.2} parent=0 // loop_header
    %s10 = sphi 0, %s14
    %p11 = scmp.ge.s32.totalorder %s10, 4
    %s17 = sphi 0, %s29
    %s18 = sphi 0, %s25
    %s19 = sphi 0, %s17
    %s20 = sphi 0, %s18
    %s21 = sphi 0, %s19
    %s22 = sphi 0, %s20
    %s34 = sphi 0, %s36
    %s37 = sphi 0, %s34
    %s38 = sphi 0, %s37
    %s54 = sphi 0, %s38
    %s60 = sphi 0, %s62
    %s63 = sphi 0, %s60
    %s64 = sphi 0, %s63
    %s80 = sphi 0, %s64
    %s84 = sphi 0, %s84
    %s86 = sphi 0, %s84
    %s87 = sphi 0, %s86
    %s101 = sphi 0, %s87
    %s105 = sphi 0, %s105
    %s107 = sphi 0, %s105
    %s108 = sphi 0, %s107
    %s122 = sphi 0, %s108
    %s128 = sphi 0, %s130
    %s131 = sphi 0, %s128
    %s132 = sphi 0, %s131
    %s148 = sphi 0, %s132
  $region4: #{glcn_forward.2} parent=0 // loop_header_branch
    %13 = sbr.rel (%p11) target = $region8
  $region5: #{glcn_forward.2} parent=0 // loop_body
    %s15 = ssub.s32 %s10, 1
    %s16 = ssub.s32 %s10, 2
    %s23 = sadd.s32 1, %s18
    %p24 = scmp.ge.s32.totalorder %s23, 1
    %s25 = scalar_select %p24, 0, %s23
    %s26 = sadd.s32 1, %s17
    %s27 = scalar_select %p24, %s26, %s17
    %p28 = scmp.ge.s32.totalorder %s27, 2
    %s29 = scalar_select %p28, 0, %s27
    %s30 = ssub.s32 %s17, %s29
    %s31 = ssub.s32 %s18, %s25
    %s32 = sor.u32 %s30, %s31
    %p33 = scmp.eq.s32.totalorder %s32, 0
    %s35 = sadd.s32 %s34, 1
    %s36 = scalar_select %p33, %s34, %s35
    %p39 = pneg %p33
    %p40 = scmp.eq.s32.totalorder %s10, 1
    %p41 = por %p39, %p40
    %p42 = scmp.ne.s32.totalorder %s34, %s37
    %p43 = scmp.eq.s32.totalorder %s10, 0
    %p44 = por %p42, %p43
    %p45 = scmp.ne.s32.totalorder %s34, %s37
    %p46 = scmp.eq.s32.totalorder %s15, 1
    %p47 = por %p45, %p46
    %p48 = scmp.ne.s32.totalorder %s37, %s38
    %p49 = scmp.eq.s32.totalorder %s15, 0
    %p50 = por %p48, %p49
    %p51 = scmp.ne.s32.totalorder %s37, %s38
    %p52 = scmp.eq.s32.totalorder %s16, 1
    %p53 = por %p51, %p52
    %p55 = scmp.ne.s32.totalorder %s38, %s54
    %p56 = scmp.eq.s32.totalorder %s16, 0
    %p57 = por %p55, %p56
    %s58 = ssub.s32 %s18, %s25
    %p59 = scmp.eq.s32.totalorder %s58, 0
    %s61 = sadd.s32 %s60, 1
    %s62 = scalar_select %p59, %s60, %s61
    %p65 = pneg %p59
    %p66 = scmp.eq.s32.totalorder %s10, 1
    %p67 = por %p65, %p66
    %p68 = scmp.ne.s32.totalorder %s60, %s63
    %p69 = scmp.eq.s32.totalorder %s10, 0
    %p70 = por %p68, %p69
    %p71 = scmp.ne.s32.totalorder %s60, %s63
    %p72 = scmp.eq.s32.totalorder %s15, 1
    %p73 = por %p71, %p72
    %p74 = scmp.ne.s32.totalorder %s63, %s64
    %p75 = scmp.eq.s32.totalorder %s15, 0
    %p76 = por %p74, %p75
    %p77 = scmp.ne.s32.totalorder %s63, %s64
    %p78 = scmp.eq.s32.totalorder %s16, 1
    %p79 = por %p77, %p78
    %p81 = scmp.ne.s32.totalorder %s64, %s80
    %p82 = scmp.eq.s32.totalorder %s16, 0
    %p83 = por %p81, %p82
    %s85 = sadd.s32 %s84, 1
    %p88 = scmp.eq.s32.totalorder %s10, 1
    %p89 = scmp.ne.s32.totalorder %s84, %s86
    %p90 = scmp.eq.s32.totalorder %s10, 0
    %p91 = por %p89, %p90
    %p92 = scmp.ne.s32.totalorder %s84, %s86
    %p93 = scmp.eq.s32.totalorder %s15, 1
    %p94 = por %p92, %p93
    %p95 = scmp.ne.s32.totalorder %s86, %s87
    %p96 = scmp.eq.s32.totalorder %s15, 0
    %p97 = por %p95, %p96
    %p98 = scmp.ne.s32.totalorder %s86, %s87
    %p99 = scmp.eq.s32.totalorder %s16, 1
    %p100 = por %p98, %p99
    %p102 = scmp.ne.s32.totalorder %s87, %s101
    %p103 = scmp.eq.s32.totalorder %s16, 0
    %p104 = por %p102, %p103
    %s106 = sadd.s32 %s105, 1
    %p109 = scmp.eq.s32.totalorder %s10, 1
    %p110 = scmp.ne.s32.totalorder %s105, %s107
    %p111 = scmp.eq.s32.totalorder %s10, 0
    %p112 = por %p110, %p111
    %p113 = scmp.ne.s32.totalorder %s105, %s107
    %p114 = scmp.eq.s32.totalorder %s15, 1
    %p115 = por %p113, %p114
    %p116 = scmp.ne.s32.totalorder %s107, %s108
    %p117 = scmp.eq.s32.totalorder %s15, 0
    %p118 = por %p116, %p117
    %p119 = scmp.ne.s32.totalorder %s107, %s108
    %p120 = scmp.eq.s32.totalorder %s16, 1
    %p121 = por %p119, %p120
    %p123 = scmp.ne.s32.totalorder %s108, %s122
    %p124 = scmp.eq.s32.totalorder %s16, 0
    %p125 = por %p123, %p124
    %s126 = ssub.s32 %s17, %s29
    %p127 = scmp.eq.s32.totalorder %s126, 0
    %s129 = sadd.s32 %s128, 1
    %s130 = scalar_select %p127, %s128, %s129
    %p133 = pneg %p127
    %p134 = scmp.eq.s32.totalorder %s10, 1
    %p135 = por %p133, %p134
    %p136 = scmp.ne.s32.totalorder %s128, %s131
    %p137 = scmp.eq.s32.totalorder %s10, 0
    %p138 = por %p136, %p137
    %p139 = scmp.ne.s32.totalorder %s128, %s131
    %p140 = scmp.eq.s32.totalorder %s15, 1
    %p141 = por %p139, %p140
    %p142 = scmp.ne.s32.totalorder %s131, %s132
    %p143 = scmp.eq.s32.totalorder %s15, 0
    %p144 = por %p142, %p143
    %p145 = scmp.ne.s32.totalorder %s131, %s132
    %p146 = scmp.eq.s32.totalorder %s16, 1
    %p147 = por %p145, %p146
    %p149 = scmp.ne.s32.totalorder %s132, %s148
    %p150 = scmp.eq.s32.totalorder %s16, 0
    %p151 = por %p149, %p150
    %p152 = scmp.le.s32.totalorder 1, %s10
    %p153 = scmp.lt.s32.totalorder %s10, 3
    %p154 = pnand %p152, %p153
    %p155 = pneg %p154
    // Predicated region
    $region9: #{glcn_forward.2} parent=5 // pred_check
      _
    $region10: #{glcn_forward.2} parent=5 // pred_check_branch
      %157 = sbr.rel (%p154) target = $region12
    $region11: #{glcn_forward.2} parent=5 // pred_region
      %s158 = ssub.s32 %s10, 1
      // Predicated region
      $region13: #{glcn_forward.2} parent=11 // pred_check
        %p159 = pneg %p76
      $region14: #{glcn_forward.2} parent=11 // pred_check_branch
        %161 = sbr.rel (%p159) target = $region16
      $region15: #{glcn_forward.2} parent=11 // pred_region
        %s162 = smul.u32 128, %s20
        %p163 = scmp.lt.s32.totalorder %s162, 127
        %s164 = scalar_select %p163, %s162, 127
        %s165 = smul.addr %s164, 4
        %s166 = scalar_lea.vmem %s1, %s165
        %s167 = smul.u32 128, %s20
      $region16: #{glcn_forward.2} parent=11 // pred_fallthru
        _
      // Predicated region
      $region17: #{glcn_forward.2} parent=11 // pred_check
        %p168 = pneg %p97
      $region18: #{glcn_forward.2} parent=11 // pred_check_branch
        %170 = sbr.rel (%p168) target = $region20
      $region19: #{glcn_forward.2} parent=11 // pred_region
        _
      $region20: #{glcn_forward.2} parent=11 // pred_fallthru
        _
      // Predicated region
      $region21: #{glcn_forward.2} parent=11 // pred_check
        %p171 = pneg %p118
      $region22: #{glcn_forward.2} parent=11 // pred_check_branch
        %173 = sbr.rel (%p171) target = $region24
      $region23: #{glcn_forward.2} parent=11 // pred_region
        _
      $region24: #{glcn_forward.2} parent=11 // pred_fallthru
        _
    $region12: #{glcn_forward.2} parent=5 // pred_fallthru
      _
    %p174 = scmp.lt.s32.totalorder %s10, 2
    // Predicated region
    $region25: #{glcn_forward.2} parent=5 // pred_check
      %p175 = pneg %p174
    $region26: #{glcn_forward.2} parent=5 // pred_check_branch
      %177 = sbr.rel (%p175) target = $region28
    $region27: #{glcn_forward.2} parent=5 // pred_region
      // Predicated region
      $region29: #{glcn_forward.2} parent=27 // pred_check
        %p178 = pneg %p44
      $region30: #{glcn_forward.2} parent=27 // pred_check_branch
        %180 = sbr.rel (%p178) target = $region32
      $region31: #{glcn_forward.2} parent=27 // pred_region
        %s181 = smul.u32 8, %s18
        %p182 = scmp.lt.s32.totalorder %s17, 1
        %s183 = scalar_select %p182, %s17, 1
        %p184 = scmp.lt.s32.totalorder %s181, 7
        %s185 = scalar_select %p184, %s181, 7
        %s186 = smul.addr %s183, 8
        %s187 = sadd.s32 %s185, %s186
        %s188 = smul.addr %s187, 8
        %s189 = scalar_lea.vmem %s0, %s188
        %s190 = smul.u32 8, %s18
      $region32: #{glcn_forward.2} parent=27 // pred_fallthru
        _
    $region28: #{glcn_forward.2} parent=5 // pred_fallthru
      _
    %p191 = scmp.le.s32.totalorder 1, %s10
    %p192 = scmp.lt.s32.totalorder %s10, 3
    %p193 = pnand %p191, %p192
    %p194 = pneg %p193
    // Predicated region
    $region33: #{glcn_forward.2} parent=5 // pred_check
      _
    $region34: #{glcn_forward.2} parent=5 // pred_check_branch
      %196 = sbr.rel (%p193) target = $region36
    $region35: #{glcn_forward.2} parent=5 // pred_region
      %s197 = ssub.s32 %s10, 1
      %s198 = smul.u32 8, %s20
      %p199 = scmp.lt.s32.totalorder %s19, 1
      %s200 = scalar_select %p199, %s19, 1
      %p201 = scmp.lt.s32.totalorder %s198, 7
      %s202 = scalar_select %p201, %s198, 7
      %s203 = smul.addr %s200, 8
      %s204 = sadd.s32 %s202, %s203
      %s205 = smul.addr %s204, 8
      %s206 = scalar_lea.vmem %s0, %s205
      %p207 = pneg %p50
      %p208 = pneg %p47
      %s209 = smul.u32 128, %s20
      %p210 = scmp.lt.s32.totalorder %s209, 127
      %s211 = scalar_select %p210, %s209, 127
      %s212 = smul.addr %s211, 4
      %s213 = scalar_lea.vmem %s1, %s212
      %p214 = pneg %p76
      %p215 = pneg %p73
      %p216 = pneg %p97
      %p217 = pneg %p94
      %p218 = pneg %p118
      %p219 = pneg %p115
      %p220 = pneg %p144
      %p221 = pneg %p141
      %p222 = scmp.lt.s32.totalorder %s19, 1
      %s223 = scalar_select %p222, %s19, 1
      %s224 = smul.addr %s223, 8
      %s225 = scalar_lea.vmem %s4, %s224
      %s226 = smul.u32 8, %s20
      %p227 = scmp.lt.s32.totalorder %s19, 1
      %s228 = scalar_select %p227, %s19, 1
      %p229 = scmp.lt.s32.totalorder %s226, 7
      %s230 = scalar_select %p229, %s226, 7
      %s231 = smul.addr %s228, 8
      %s232 = sadd.s32 %s230, %s231
      %s233 = smul.addr %s232, 8
      %s234 = scalar_lea.vmem %s0, %s233
      %s235 = smul.u32 8, %s20
      %s236 = smul.u32 128, %s20
      %p237 = scmp.lt.s32.totalorder %s236, 127
      %s238 = scalar_select %p237, %s236, 127
      %s239 = smul.addr %s238, 4
      %s240 = scalar_lea.vmem %s1, %s239
      %s241 = smul.u32 128, %s20
      %p242 = scmp.lt.s32.totalorder %s19, 1
      %s243 = scalar_select %p242, %s19, 1
      %s244 = smul.addr %s243, 8
      %s245 = scalar_lea.vmem %s4, %s244
      %p247 = scmp.eq.s32.totalorder %s20, 0
      // Predicated region
      $region37: #{glcn_forward.2} parent=35 // pred_check
        %p248 = pneg %p247
      $region38: #{glcn_forward.2} parent=35 // pred_check_branch
        %250 = sbr.rel (%p248) target = $region40
      $region39: #{glcn_forward.2} parent=35 // pred_region
        %251 = vst [vmem:[#allocation2] sm:$0xff] 0.0
      $region40: #{glcn_forward.2} parent=35 // pred_fallthru
        _
      %v252 = vld [vmem:[#allocation2] sm:$0xff]
      %v253 = vld [vmem:[%s234] sm:$0xff]
      %v254 = vld [vmem:[%s234 + $0x8] sm:$0xff]
      %v255 = vld [vmem:[%s234 + $0x10] sm:$0xff]
      %v256 = vld [vmem:[%s234 + $0x18] sm:$0xff]
      %v257 = vld [vmem:[%s234 + $0x20] sm:$0xff]
      %v258 = vld [vmem:[%s234 + $0x28] sm:$0xff]
      %v259 = vld [vmem:[%s234 + $0x30] sm:$0xff]
      %v260 = vld [vmem:[%s234 + $0x38] sm:$0xff]
      %v261 = vpack.c.bf16 %v253, %v253
      %v262 = vpack.c.bf16 %v254, %v254
      %v263 = vpack.c.bf16 %v255, %v255
      %v264 = vpack.c.bf16 %v256, %v256
      %v265 = vpack.c.bf16 %v257, %v257
      %v266 = vpack.c.bf16 %v258, %v258
      %v267 = vpack.c.bf16 %v259, %v259
      %v268 = vpack.c.bf16 %v260, %v260
      %v269 = vld [vmem:[%s240] sm:$0xf]
      %v270 = vld [vmem:[%s240 + $0x4] sm:$0xf]
      %v271 = vld [vmem:[%s240 + $0x8] sm:$0xf]
      %v272 = vld [vmem:[%s240 + $0xc] sm:$0xf]
      %v273 = vld [vmem:[%s240 + $0x10] sm:$0xf]
      %v274 = vld [vmem:[%s240 + $0x14] sm:$0xf]
      %v275 = vld [vmem:[%s240 + $0x18] sm:$0xf]
      %v276 = vld [vmem:[%s240 + $0x1c] sm:$0xf]
      %v277 = vld [vmem:[%s240 + $0x20] sm:$0xf]
      %v278 = vld [vmem:[%s240 + $0x24] sm:$0xf]
      %v279 = vld [vmem:[%s240 + $0x28] sm:$0xf]
      %v280 = vld [vmem:[%s240 + $0x2c] sm:$0xf]
      %v281 = vld [vmem:[%s240 + $0x30] sm:$0xf]
      %v282 = vld [vmem:[%s240 + $0x34] sm:$0xf]
      %v283 = vld [vmem:[%s240 + $0x38] sm:$0xf]
      %v284 = vld [vmem:[%s240 + $0x3c] sm:$0xf]
      %v285 = vld [vmem:[%s240 + $0x40] sm:$0xf]
      %v286 = vld [vmem:[%s240 + $0x44] sm:$0xf]
      %v287 = vld [vmem:[%s240 + $0x48] sm:$0xf]
      %v288 = vld [vmem:[%s240 + $0x4c] sm:$0xf]
      %v289 = vld [vmem:[%s240 + $0x50] sm:$0xf]
      %v290 = vld [vmem:[%s240 + $0x54] sm:$0xf]
      %v291 = vld [vmem:[%s240 + $0x58] sm:$0xf]
      %v292 = vld [vmem:[%s240 + $0x5c] sm:$0xf]
      %v293 = vld [vmem:[%s240 + $0x60] sm:$0xf]
      %v294 = vld [vmem:[%s240 + $0x64] sm:$0xf]
      %v295 = vld [vmem:[%s240 + $0x68] sm:$0xf]
      %v296 = vld [vmem:[%s240 + $0x6c] sm:$0xf]
      %v297 = vld [vmem:[%s240 + $0x70] sm:$0xf]
      %v298 = vld [vmem:[%s240 + $0x74] sm:$0xf]
      %v299 = vld [vmem:[%s240 + $0x78] sm:$0xf]
      %v300 = vld [vmem:[%s240 + $0x7c] sm:$0xf]
      %v301 = vld [vmem:[%s240 + $0x80] sm:$0xf]
      %v302 = vld [vmem:[%s240 + $0x84] sm:$0xf]
      %v303 = vld [vmem:[%s240 + $0x88] sm:$0xf]
      %v304 = vld [vmem:[%s240 + $0x8c] sm:$0xf]
      %v305 = vld [vmem:[%s240 + $0x90] sm:$0xf]
      %v306 = vld [vmem:[%s240 + $0x94] sm:$0xf]
      %v307 = vld [vmem:[%s240 + $0x98] sm:$0xf]
      %v308 = vld [vmem:[%s240 + $0x9c] sm:$0xf]
      %v309 = vld [vmem:[%s240 + $0xa0] sm:$0xf]
      %v310 = vld [vmem:[%s240 + $0xa4] sm:$0xf]
      %v311 = vld [vmem:[%s240 + $0xa8] sm:$0xf]
      %v312 = vld [vmem:[%s240 + $0xac] sm:$0xf]
      %v313 = vld [vmem:[%s240 + $0xb0] sm:$0xf]
      %v314 = vld [vmem:[%s240 + $0xb4] sm:$0xf]
      %v315 = vld [vmem:[%s240 + $0xb8] sm:$0xf]
      %v316 = vld [vmem:[%s240 + $0xbc] sm:$0xf]
      %v317 = vld [vmem:[%s240 + $0xc0] sm:$0xf]
      %v318 = vld [vmem:[%s240 + $0xc4] sm:$0xf]
      %v319 = vld [vmem:[%s240 + $0xc8] sm:$0xf]
      %v320 = vld [vmem:[%s240 + $0xcc] sm:$0xf]
      %v321 = vld [vmem:[%s240 + $0xd0] sm:$0xf]
      %v322 = vld [vmem:[%s240 + $0xd4] sm:$0xf]
      %v323 = vld [vmem:[%s240 + $0xd8] sm:$0xf]
      %v324 = vld [vmem:[%s240 + $0xdc] sm:$0xf]
      %v325 = vld [vmem:[%s240 + $0xe0] sm:$0xf]
      %v326 = vld [vmem:[%s240 + $0xe4] sm:$0xf]
      %v327 = vld [vmem:[%s240 + $0xe8] sm:$0xf]
      %v328 = vld [vmem:[%s240 + $0xec] sm:$0xf]
      %v329 = vld [vmem:[%s240 + $0xf0] sm:$0xf]
      %v330 = vld [vmem:[%s240 + $0xf4] sm:$0xf]
      %v331 = vld [vmem:[%s240 + $0xf8] sm:$0xf]
      %v332 = vld [vmem:[%s240 + $0xfc] sm:$0xf]
      %v333 = vld [vmem:[%s240 + $0x100] sm:$0xf]
      %v334 = vld [vmem:[%s240 + $0x104] sm:$0xf]
      %v335 = vld [vmem:[%s240 + $0x108] sm:$0xf]
      %v336 = vld [vmem:[%s240 + $0x10c] sm:$0xf]
      %v337 = vld [vmem:[%s240 + $0x110] sm:$0xf]
      %v338 = vld [vmem:[%s240 + $0x114] sm:$0xf]
      %v339 = vld [vmem:[%s240 + $0x118] sm:$0xf]
      %v340 = vld [vmem:[%s240 + $0x11c] sm:$0xf]
      %v341 = vld [vmem:[%s240 + $0x120] sm:$0xf]
      %v342 = vld [vmem:[%s240 + $0x124] sm:$0xf]
      %v343 = vld [vmem:[%s240 + $0x128] sm:$0xf]
      %v344 = vld [vmem:[%s240 + $0x12c] sm:$0xf]
      %v345 = vld [vmem:[%s240 + $0x130] sm:$0xf]
      %v346 = vld [vmem:[%s240 + $0x134] sm:$0xf]
      %v347 = vld [vmem:[%s240 + $0x138] sm:$0xf]
      %v348 = vld [vmem:[%s240 + $0x13c] sm:$0xf]
      %v349 = vld [vmem:[%s240 + $0x140] sm:$0xf]
      %v350 = vld [vmem:[%s240 + $0x144] sm:$0xf]
      %v351 = vld [vmem:[%s240 + $0x148] sm:$0xf]
      %v352 = vld [vmem:[%s240 + $0x14c] sm:$0xf]
      %v353 = vld [vmem:[%s240 + $0x150] sm:$0xf]
      %v354 = vld [vmem:[%s240 + $0x154] sm:$0xf]
      %v355 = vld [vmem:[%s240 + $0x158] sm:$0xf]
      %v356 = vld [vmem:[%s240 + $0x15c] sm:$0xf]
      %v357 = vld [vmem:[%s240 + $0x160] sm:$0xf]
      %v358 = vld [vmem:[%s240 + $0x164] sm:$0xf]
      %v359 = vld [vmem:[%s240 + $0x168] sm:$0xf]
      %v360 = vld [vmem:[%s240 + $0x16c] sm:$0xf]
      %v361 = vld [vmem:[%s240 + $0x170] sm:$0xf]
      %v362 = vld [vmem:[%s240 + $0x174] sm:$0xf]
      %v363 = vld [vmem:[%s240 + $0x178] sm:$0xf]
      %v364 = vld [vmem:[%s240 + $0x17c] sm:$0xf]
      %v365 = vld [vmem:[%s240 + $0x180] sm:$0xf]
      %v366 = vld [vmem:[%s240 + $0x184] sm:$0xf]
      %v367 = vld [vmem:[%s240 + $0x188] sm:$0xf]
      %v368 = vld [vmem:[%s240 + $0x18c] sm:$0xf]
      %v369 = vld [vmem:[%s240 + $0x190] sm:$0xf]
      %v370 = vld [vmem:[%s240 + $0x194] sm:$0xf]
      %v371 = vld [vmem:[%s240 + $0x198] sm:$0xf]
      %v372 = vld [vmem:[%s240 + $0x19c] sm:$0xf]
      %v373 = vld [vmem:[%s240 + $0x1a0] sm:$0xf]
      %v374 = vld [vmem:[%s240 + $0x1a4] sm:$0xf]
      %v375 = vld [vmem:[%s240 + $0x1a8] sm:$0xf]
      %v376 = vld [vmem:[%s240 + $0x1ac] sm:$0xf]
      %v377 = vld [vmem:[%s240 + $0x1b0] sm:$0xf]
      %v378 = vld [vmem:[%s240 + $0x1b4] sm:$0xf]
      %v379 = vld [vmem:[%s240 + $0x1b8] sm:$0xf]
      %v380 = vld [vmem:[%s240 + $0x1bc] sm:$0xf]
      %v381 = vld [vmem:[%s240 + $0x1c0] sm:$0xf]
      %v382 = vld [vmem:[%s240 + $0x1c4] sm:$0xf]
      %v383 = vld [vmem:[%s240 + $0x1c8] sm:$0xf]
      %v384 = vld [vmem:[%s240 + $0x1cc] sm:$0xf]
      %v385 = vld [vmem:[%s240 + $0x1d0] sm:$0xf]
      %v386 = vld [vmem:[%s240 + $0x1d4] sm:$0xf]
      %v387 = vld [vmem:[%s240 + $0x1d8] sm:$0xf]
      %v388 = vld [vmem:[%s240 + $0x1dc] sm:$0xf]
      %v389 = vld [vmem:[%s240 + $0x1e0] sm:$0xf]
      %v390 = vld [vmem:[%s240 + $0x1e4] sm:$0xf]
      %v391 = vld [vmem:[%s240 + $0x1e8] sm:$0xf]
      %v392 = vld [vmem:[%s240 + $0x1ec] sm:$0xf]
      %v393 = vld [vmem:[%s240 + $0x1f0] sm:$0xf]
      %v394 = vld [vmem:[%s240 + $0x1f4] sm:$0xf]
      %v395 = vld [vmem:[%s240 + $0x1f8] sm:$0xf]
      %v396 = vld [vmem:[%s240 + $0x1fc] sm:$0xf]
      %v525 = vunpack.c.l.b16 %v269
      %v526 = vunpack.c.l.b16 %v270
      %v527 = vunpack.c.l.b16 %v271
      %v528 = vunpack.c.l.b16 %v272
      %v529 = vunpack.c.l.b16 %v273
      %v530 = vunpack.c.l.b16 %v274
      %v531 = vunpack.c.l.b16 %v275
      %v532 = vunpack.c.l.b16 %v276
      %v533 = vunpack.c.l.b16 %v277
      %v534 = vunpack.c.l.b16 %v278
      %v535 = vunpack.c.l.b16 %v279
      %v536 = vunpack.c.l.b16 %v280
      %v537 = vunpack.c.l.b16 %v281
      %v538 = vunpack.c.l.b16 %v282
      %v539 = vunpack.c.l.b16 %v283
      %v540 = vunpack.c.l.b16 %v284
      %v541 = vunpack.c.l.b16 %v285
      %v542 = vunpack.c.l.b16 %v286
      %v543 = vunpack.c.l.b16 %v287
      %v544 = vunpack.c.l.b16 %v288
      %v545 = vunpack.c.l.b16 %v289
      %v546 = vunpack.c.l.b16 %v290
      %v547 = vunpack.c.l.b16 %v291
      %v548 = vunpack.c.l.b16 %v292
      %v549 = vunpack.c.l.b16 %v293
      %v550 = vunpack.c.l.b16 %v294
      %v551 = vunpack.c.l.b16 %v295
      %v552 = vunpack.c.l.b16 %v296
      %v553 = vunpack.c.l.b16 %v297
      %v554 = vunpack.c.l.b16 %v298
      %v555 = vunpack.c.l.b16 %v299
      %v556 = vunpack.c.l.b16 %v300
      %v557 = vunpack.c.l.b16 %v301
      %v558 = vunpack.c.l.b16 %v302
      %v559 = vunpack.c.l.b16 %v303
      %v560 = vunpack.c.l.b16 %v304
      %v561 = vunpack.c.l.b16 %v305
      %v562 = vunpack.c.l.b16 %v306
      %v563 = vunpack.c.l.b16 %v307
      %v564 = vunpack.c.l.b16 %v308
      %v565 = vunpack.c.l.b16 %v309
      %v566 = vunpack.c.l.b16 %v310
      %v567 = vunpack.c.l.b16 %v311
      %v568 = vunpack.c.l.b16 %v312
      %v569 = vunpack.c.l.b16 %v313
      %v570 = vunpack.c.l.b16 %v314
      %v571 = vunpack.c.l.b16 %v315
      %v572 = vunpack.c.l.b16 %v316
      %v573 = vunpack.c.l.b16 %v317
      %v574 = vunpack.c.l.b16 %v318
      %v575 = vunpack.c.l.b16 %v319
      %v576 = vunpack.c.l.b16 %v320
      %v577 = vunpack.c.l.b16 %v321
      %v578 = vunpack.c.l.b16 %v322
      %v579 = vunpack.c.l.b16 %v323
      %v580 = vunpack.c.l.b16 %v324
      %v581 = vunpack.c.l.b16 %v325
      %v582 = vunpack.c.l.b16 %v326
      %v583 = vunpack.c.l.b16 %v327
      %v584 = vunpack.c.l.b16 %v328
      %v585 = vunpack.c.l.b16 %v329
      %v586 = vunpack.c.l.b16 %v330
      %v587 = vunpack.c.l.b16 %v331
      %v588 = vunpack.c.l.b16 %v332
      %v589 = vunpack.c.l.b16 %v333
      %v590 = vunpack.c.l.b16 %v334
      %v591 = vunpack.c.l.b16 %v335
      %v592 = vunpack.c.l.b16 %v336
      %v593 = vunpack.c.l.b16 %v337
      %v594 = vunpack.c.l.b16 %v338
      %v595 = vunpack.c.l.b16 %v339
      %v596 = vunpack.c.l.b16 %v340
      %v597 = vunpack.c.l.b16 %v341
      %v598 = vunpack.c.l.b16 %v342
      %v599 = vunpack.c.l.b16 %v343
      %v600 = vunpack.c.l.b16 %v344
      %v601 = vunpack.c.l.b16 %v345
      %v602 = vunpack.c.l.b16 %v346
      %v603 = vunpack.c.l.b16 %v347
      %v604 = vunpack.c.l.b16 %v348
      %v605 = vunpack.c.l.b16 %v349
      %v606 = vunpack.c.l.b16 %v350
      %v607 = vunpack.c.l.b16 %v351
      %v608 = vunpack.c.l.b16 %v352
      %v609 = vunpack.c.l.b16 %v353
      %v610 = vunpack.c.l.b16 %v354
      %v611 = vunpack.c.l.b16 %v355
      %v612 = vunpack.c.l.b16 %v356
      %v613 = vunpack.c.l.b16 %v357
      %v614 = vunpack.c.l.b16 %v358
      %v615 = vunpack.c.l.b16 %v359
      %v616 = vunpack.c.l.b16 %v360
      %v617 = vunpack.c.l.b16 %v361
      %v618 = vunpack.c.l.b16 %v362
      %v619 = vunpack.c.l.b16 %v363
      %v620 = vunpack.c.l.b16 %v364
      %v621 = vunpack.c.l.b16 %v365
      %v622 = vunpack.c.l.b16 %v366
      %v623 = vunpack.c.l.b16 %v367
      %v624 = vunpack.c.l.b16 %v368
      %v625 = vunpack.c.l.b16 %v369
      %v626 = vunpack.c.l.b16 %v370
      %v627 = vunpack.c.l.b16 %v371
      %v628 = vunpack.c.l.b16 %v372
      %v629 = vunpack.c.l.b16 %v373
      %v630 = vunpack.c.l.b16 %v374
      %v631 = vunpack.c.l.b16 %v375
      %v632 = vunpack.c.l.b16 %v376
      %v633 = vunpack.c.l.b16 %v377
      %v634 = vunpack.c.l.b16 %v378
      %v635 = vunpack.c.l.b16 %v379
      %v636 = vunpack.c.l.b16 %v380
      %v637 = vunpack.c.l.b16 %v381
      %v638 = vunpack.c.l.b16 %v382
      %v639 = vunpack.c.l.b16 %v383
      %v640 = vunpack.c.l.b16 %v384
      %v641 = vunpack.c.l.b16 %v385
      %v642 = vunpack.c.l.b16 %v386
      %v643 = vunpack.c.l.b16 %v387
      %v644 = vunpack.c.l.b16 %v388
      %v645 = vunpack.c.l.b16 %v389
      %v646 = vunpack.c.l.b16 %v390
      %v647 = vunpack.c.l.b16 %v391
      %v648 = vunpack.c.l.b16 %v392
      %v649 = vunpack.c.l.b16 %v393
      %v650 = vunpack.c.l.b16 %v394
      %v651 = vunpack.c.l.b16 %v395
      %v652 = vunpack.c.l.b16 %v396
      %v653 = vpack.c.b16 %v526, %v525
      %v654 = vpack.c.b16 %v528, %v527
      %v655 = vpack.c.b16 %v530, %v529
      %v656 = vpack.c.b16 %v532, %v531
      %v657 = vpack.c.b16 %v534, %v533
      %v658 = vpack.c.b16 %v536, %v535
      %v659 = vpack.c.b16 %v538, %v537
      %v660 = vpack.c.b16 %v540, %v539
      %v661 = vpack.c.b16 %v542, %v541
      %v662 = vpack.c.b16 %v544, %v543
      %v663 = vpack.c.b16 %v546, %v545
      %v664 = vpack.c.b16 %v548, %v547
      %v665 = vpack.c.b16 %v550, %v549
      %v666 = vpack.c.b16 %v552, %v551
      %v667 = vpack.c.b16 %v554, %v553
      %v668 = vpack.c.b16 %v556, %v555
      %v669 = vpack.c.b16 %v558, %v557
      %v670 = vpack.c.b16 %v560, %v559
      %v671 = vpack.c.b16 %v562, %v561
      %v672 = vpack.c.b16 %v564, %v563
      %v673 = vpack.c.b16 %v566, %v565
      %v674 = vpack.c.b16 %v568, %v567
      %v675 = vpack.c.b16 %v570, %v569
      %v676 = vpack.c.b16 %v572, %v571
      %v677 = vpack.c.b16 %v574, %v573
      %v678 = vpack.c.b16 %v576, %v575
      %v679 = vpack.c.b16 %v578, %v577
      %v680 = vpack.c.b16 %v580, %v579
      %v681 = vpack.c.b16 %v582, %v581
      %v682 = vpack.c.b16 %v584, %v583
      %v683 = vpack.c.b16 %v586, %v585
      %v684 = vpack.c.b16 %v588, %v587
      %v685 = vpack.c.b16 %v590, %v589
      %v686 = vpack.c.b16 %v592, %v591
      %v687 = vpack.c.b16 %v594, %v593
      %v688 = vpack.c.b16 %v596, %v595
      %v689 = vpack.c.b16 %v598, %v597
      %v690 = vpack.c.b16 %v600, %v599
      %v691 = vpack.c.b16 %v602, %v601
      %v692 = vpack.c.b16 %v604, %v603
      %v693 = vpack.c.b16 %v606, %v605
      %v694 = vpack.c.b16 %v608, %v607
      %v695 = vpack.c.b16 %v610, %v609
      %v696 = vpack.c.b16 %v612, %v611
      %v697 = vpack.c.b16 %v614, %v613
      %v698 = vpack.c.b16 %v616, %v615
      %v699 = vpack.c.b16 %v618, %v617
      %v700 = vpack.c.b16 %v620, %v619
      %v701 = vpack.c.b16 %v622, %v621
      %v702 = vpack.c.b16 %v624, %v623
      %v703 = vpack.c.b16 %v626, %v625
      %v704 = vpack.c.b16 %v628, %v627
      %v705 = vpack.c.b16 %v630, %v629
      %v706 = vpack.c.b16 %v632, %v631
      %v707 = vpack.c.b16 %v634, %v633
      %v708 = vpack.c.b16 %v636, %v635
      %v709 = vpack.c.b16 %v638, %v637
      %v710 = vpack.c.b16 %v640, %v639
      %v711 = vpack.c.b16 %v642, %v641
      %v712 = vpack.c.b16 %v644, %v643
      %v713 = vpack.c.b16 %v646, %v645
      %v714 = vpack.c.b16 %v648, %v647
      %v715 = vpack.c.b16 %v650, %v649
      %v716 = vpack.c.b16 %v652, %v651
      %781 = vmatprep.subr.bf16.mxu0 0
      %782 = vmatpush1.bf16.msra.mxu0 %v660
      %783 = vmatprep.subr.bf16.mxu0 0
      %784 = vmatpush1.bf16.msra.mxu0 %v659
      %785 = vmatprep.subr.bf16.mxu0 0
      %786 = vmatpush1.bf16.msra.mxu0 %v658
      %787 = vmatprep.subr.bf16.mxu0 0
      %788 = vmatpush1.bf16.msra.mxu0 %v657
      %789 = vmatprep.subr.bf16.mxu0 0
      %790 = vmatpush1.bf16.msra.mxu0 %v656
      %791 = vmatprep.subr.bf16.mxu0 0
      %792 = vmatpush1.bf16.msra.mxu0 %v655
      %793 = vmatprep.subr.bf16.mxu0 0
      %794 = vmatpush1.bf16.msra.mxu0 %v654
      %795 = vmatprep.subr.bf16.mxu0 0
      %796 = vmatpush1.bf16.msra.mxu0 %v653
      %797 = vmatprep.subr.bf16.mxu0 0
      %798 = vmatpush2.bf16.msra.mxu0 %v668
      %799 = vmatprep.subr.bf16.mxu0 0
      %800 = vmatpush2.bf16.msra.mxu0 %v667
      %801 = vmatprep.subr.bf16.mxu0 0
      %802 = vmatpush2.bf16.msra.mxu0 %v666
      %803 = vmatprep.subr.bf16.mxu0 0
      %804 = vmatpush2.bf16.msra.mxu0 %v665
      %805 = vmatprep.subr.bf16.mxu0 0
      %806 = vmatpush2.bf16.msra.mxu0 %v664
      %807 = vmatprep.subr.bf16.mxu0 0
      %808 = vmatpush2.bf16.msra.mxu0 %v663
      %809 = vmatprep.subr.bf16.mxu0 0
      %810 = vmatpush2.bf16.msra.mxu0 %v662
      %811 = vmatprep.subr.bf16.mxu0 0
      %812 = vmatpush2.bf16.msra.mxu0 %v661
      %813 = vmatprep.mubr.bf16.mxu0 %v262
      %814 = vmatmul.mubr.bf16.gmra.mxu0 %v261
      %v815 = vpop.f32.mrf.mxu0
      %v816 = vadd.f32 0.0, %v815
      %v817 = vpop.f32.mrf.mxu0
      %v818 = vpop.f32.mrf.mxu0
      %v819 = vpop.f32.mrf.mxu0
      %820 = vdwg.mxu0
      %821 = vmatprep.subr.bf16.mxu0 0
      %822 = vmatpush1.bf16.msra.mxu0 %v676
      %823 = vmatprep.subr.bf16.mxu0 0
      %824 = vmatpush1.bf16.msra.mxu0 %v675
      %825 = vmatprep.subr.bf16.mxu0 0
      %826 = vmatpush1.bf16.msra.mxu0 %v674
      %827 = vmatprep.subr.bf16.mxu0 0
      %828 = vmatpush1.bf16.msra.mxu0 %v673
      %829 = vmatprep.subr.bf16.mxu0 0
      %830 = vmatpush1.bf16.msra.mxu0 %v672
      %831 = vmatprep.subr.bf16.mxu0 0
      %832 = vmatpush1.bf16.msra.mxu0 %v671
      %833 = vmatprep.subr.bf16.mxu0 0
      %834 = vmatpush1.bf16.msra.mxu0 %v670
      %835 = vmatprep.subr.bf16.mxu0 0
      %836 = vmatpush1.bf16.msra.mxu0 %v669
      %837 = vmatprep.subr.bf16.mxu0 0
      %838 = vmatpush2.bf16.msra.mxu0 %v684
      %839 = vmatprep.subr.bf16.mxu0 0
      %840 = vmatpush2.bf16.msra.mxu0 %v683
      %841 = vmatprep.subr.bf16.mxu0 0
      %842 = vmatpush2.bf16.msra.mxu0 %v682
      %843 = vmatprep.subr.bf16.mxu0 0
      %844 = vmatpush2.bf16.msra.mxu0 %v681
      %845 = vmatprep.subr.bf16.mxu0 0
      %846 = vmatpush2.bf16.msra.mxu0 %v680
      %847 = vmatprep.subr.bf16.mxu0 0
      %848 = vmatpush2.bf16.msra.mxu0 %v679
      %849 = vmatprep.subr.bf16.mxu0 0
      %850 = vmatpush2.bf16.msra.mxu0 %v678
      %851 = vmatprep.subr.bf16.mxu0 0
      %852 = vmatpush2.bf16.msra.mxu0 %v677
      %853 = vmatprep.mubr.bf16.mxu0 %v264
      %854 = vmatmul.mubr.bf16.gmra.mxu0 %v263
      %v855 = vpop.f32.mrf.mxu0
      %v856 = vadd.f32 %v816, %v855
      %v857 = vpop.f32.mrf.mxu0
      %v858 = vpop.f32.mrf.mxu0
      %v859 = vpop.f32.mrf.mxu0
      %860 = vdwg.mxu0
      %861 = vmatprep.subr.bf16.mxu0 0
      %862 = vmatpush1.bf16.msra.mxu0 %v692
      %863 = vmatprep.subr.bf16.mxu0 0
      %864 = vmatpush1.bf16.msra.mxu0 %v691
      %865 = vmatprep.subr.bf16.mxu0 0
      %866 = vmatpush1.bf16.msra.mxu0 %v690
      %867 = vmatprep.subr.bf16.mxu0 0
      %868 = vmatpush1.bf16.msra.mxu0 %v689
      %869 = vmatprep.subr.bf16.mxu0 0
      %870 = vmatpush1.bf16.msra.mxu0 %v688
      %871 = vmatprep.subr.bf16.mxu0 0
      %872 = vmatpush1.bf16.msra.mxu0 %v687
      %873 = vmatprep.subr.bf16.mxu0 0
      %874 = vmatpush1.bf16.msra.mxu0 %v686
      %875 = vmatprep.subr.bf16.mxu0 0
      %876 = vmatpush1.bf16.msra.mxu0 %v685
      %877 = vmatprep.subr.bf16.mxu0 0
      %878 = vmatpush2.bf16.msra.mxu0 %v700
      %879 = vmatprep.subr.bf16.mxu0 0
      %880 = vmatpush2.bf16.msra.mxu0 %v699
      %881 = vmatprep.subr.bf16.mxu0 0
      %882 = vmatpush2.bf16.msra.mxu0 %v698
      %883 = vmatprep.subr.bf16.mxu0 0
      %884 = vmatpush2.bf16.msra.mxu0 %v697
      %885 = vmatprep.subr.bf16.mxu0 0
      %886 = vmatpush2.bf16.msra.mxu0 %v696
      %887 = vmatprep.subr.bf16.mxu0 0
      %888 = vmatpush2.bf16.msra.mxu0 %v695
      %889 = vmatprep.subr.bf16.mxu0 0
      %890 = vmatpush2.bf16.msra.mxu0 %v694
      %891 = vmatprep.subr.bf16.mxu0 0
      %892 = vmatpush2.bf16.msra.mxu0 %v693
      %893 = vmatprep.mubr.bf16.mxu0 %v266
      %894 = vmatmul.mubr.bf16.gmra.mxu0 %v265
      %v895 = vpop.f32.mrf.mxu0
      %v896 = vadd.f32 %v856, %v895
      %v897 = vpop.f32.mrf.mxu0
      %v898 = vpop.f32.mrf.mxu0
      %v899 = vpop.f32.mrf.mxu0
      %900 = vdwg.mxu0
      %901 = vmatprep.subr.bf16.mxu0 0
      %902 = vmatpush1.bf16.msra.mxu0 %v708
      %903 = vmatprep.subr.bf16.mxu0 0
      %904 = vmatpush1.bf16.msra.mxu0 %v707
      %905 = vmatprep.subr.bf16.mxu0 0
      %906 = vmatpush1.bf16.msra.mxu0 %v706
      %907 = vmatprep.subr.bf16.mxu0 0
      %908 = vmatpush1.bf16.msra.mxu0 %v705
      %909 = vmatprep.subr.bf16.mxu0 0
      %910 = vmatpush1.bf16.msra.mxu0 %v704
      %911 = vmatprep.subr.bf16.mxu0 0
      %912 = vmatpush1.bf16.msra.mxu0 %v703
      %913 = vmatprep.subr.bf16.mxu0 0
      %914 = vmatpush1.bf16.msra.mxu0 %v702
      %915 = vmatprep.subr.bf16.mxu0 0
      %916 = vmatpush1.bf16.msra.mxu0 %v701
      %917 = vmatprep.subr.bf16.mxu0 0
      %918 = vmatpush2.bf16.msra.mxu0 %v716
      %919 = vmatprep.subr.bf16.mxu0 0
      %920 = vmatpush2.bf16.msra.mxu0 %v715
      %921 = vmatprep.subr.bf16.mxu0 0
      %922 = vmatpush2.bf16.msra.mxu0 %v714
      %923 = vmatprep.subr.bf16.mxu0 0
      %924 = vmatpush2.bf16.msra.mxu0 %v713
      %925 = vmatprep.subr.bf16.mxu0 0
      %926 = vmatpush2.bf16.msra.mxu0 %v712
      %927 = vmatprep.subr.bf16.mxu0 0
      %928 = vmatpush2.bf16.msra.mxu0 %v711
      %929 = vmatprep.subr.bf16.mxu0 0
      %930 = vmatpush2.bf16.msra.mxu0 %v710
      %931 = vmatprep.subr.bf16.mxu0 0
      %932 = vmatpush2.bf16.msra.mxu0 %v709
      %933 = vmatprep.mubr.bf16.mxu0 %v268
      %934 = vmatmul.mubr.bf16.gmra.mxu0 %v267
      %v935 = vpop.f32.mrf.mxu0
      %v936 = vadd.f32 %v896, %v935
      %v937 = vpop.f32.mrf.mxu0
      %v938 = vpop.f32.mrf.mxu0
      %v939 = vpop.f32.mrf.mxu0
      %940 = vdwg.mxu0
      %v941 = vadd.f32 %v252, %v936
      %942 = vst [vmem:[#allocation2] sm:$0xff] %v941
      // Predicated region
      $region41: #{glcn_forward.2} parent=35 // pred_check
        %p943 = pneg %p247
      $region42: #{glcn_forward.2} parent=35 // pred_check_branch
        %945 = sbr.rel (%p943) target = $region44
      $region43: #{glcn_forward.2} parent=35 // pred_region
        %v946 = vld [vmem:[#allocation2] sm:$0xff]
        %v947 = vrot.slane %v946, 4
        %v948 = vadd.f32 %v946, %v947
        %v949 = vrot.slane %v948, 2
        %v950 = vadd.f32 %v948, %v949
        %v951 = vrot.slane %v950, 1
        %v952 = vadd.f32 %v950, %v951
        %v953 = vrcp.pop 8.0
        %v954 = vmul.f32 %v952, %v953
        %v955 = vmul.f32 %v946, %v946
        %v956 = vrot.slane %v955, 4
        %v957 = vadd.f32 %v955, %v956
        %v958 = vrot.slane %v957, 2
        %v959 = vadd.f32 %v957, %v958
        %v960 = vrot.slane %v959, 1
        %v961 = vadd.f32 %v959, %v960
        %v962 = vmul.f32 %v961, %v953
        %v963 = vmul.f32 %v954, %v954
        %v964 = vsub.f32 %v962, %v963
        %v965 = vmax.f32 %v964, 0.0
        %v966 = vld [vmem:[%s2] sm:$0x1]
        %v967 = vld [vmem:[%s3] sm:$0x1]
        %v968 = vadd.f32 %v965, 1e-05
        %v969 = vrsqrt.pop %v968
        %v970 = vmul.f32 %v966, %v969
        %v971 = vmul.f32 %v954, %v970
        %v972 = vsub.f32 %v967, %v971
        %v974 = vlaneseq
        %v975 = vshrl.u32 %v974, 7
        %v976 = vsub.s32 0, %v975
        %v977 = vrot.slane %v970, %v976
        %v979 = vmul.f32 %v946, %v977
        %v981 = vlaneseq
        %v982 = vshrl.u32 %v981, 7
        %v983 = vsub.s32 0, %v982
        %v984 = vrot.slane %v972, %v983
        %v986 = vadd.f32 %v979, %v984
        %987 = vst [vmem:[%s245] sm:$0xff] %v986
      $region44: #{glcn_forward.2} parent=35 // pred_fallthru
        _
      %p988 = scmp.lt.s32.totalorder %s19, 1
      %s989 = scalar_select %p988, %s19, 1
      %s990 = smul.addr %s989, 8
      %s991 = scalar_lea.vmem %s4, %s990
      // Predicated region
      $region45: #{glcn_forward.2} parent=35 // pred_check
        %p992 = pneg %p141
      $region46: #{glcn_forward.2} parent=35 // pred_check_branch
        %994 = sbr.rel (%p992) target = $region48
      $region47: #{glcn_forward.2} parent=35 // pred_region
        _
      $region48: #{glcn_forward.2} parent=35 // pred_fallthru
        _
    $region36: #{glcn_forward.2} parent=5 // pred_fallthru
      _
    %p995 = scmp.le.s32.totalorder 2, %s10
    // Predicated region
    $region49: #{glcn_forward.2} parent=5 // pred_check
      %p996 = pneg %p995
    $region50: #{glcn_forward.2} parent=5 // pred_check_branch
      %998 = sbr.rel (%p996) target = $region52
    $region51: #{glcn_forward.2} parent=5 // pred_region
      %s999 = ssub.s32 %s10, 2
      // Predicated region
      $region53: #{glcn_forward.2} parent=51 // pred_check
        %p1000 = pneg %p147
      $region54: #{glcn_forward.2} parent=51 // pred_check_branch
        %1002 = sbr.rel (%p1000) target = $region56
      $region55: #{glcn_forward.2} parent=51 // pred_region
        %p1003 = scmp.lt.s32.totalorder %s21, 1
        %s1004 = scalar_select %p1003, %s21, 1
        %s1005 = smul.addr %s1004, 8
        %s1006 = scalar_lea.vmem %s4, %s1005
      $region56: #{glcn_forward.2} parent=51 // pred_fallthru
        _
    $region52: #{glcn_forward.2} parent=5 // pred_fallthru
      _
  $region6: #{glcn_forward.2} parent=0 // loop_footer
    %s14 = sadd.s32 1, %s10
  $region7: #{glcn_forward.2} parent=0 // loop_footer_branch
    %9 = sbr.rel target = $region3
  $region8: #{glcn_forward.2} parent=0 // loop_exit
    _

</llo_original>
